<compile_context>
chip_gen: v5e
topology: v5e:2x2
jax: 0.10.0
libtpu: 0.0.40
codegen_flags: <defaults>
</compile_context>

<pallas_src>
import math
import jax
import jax.numpy as jnp
from jax.experimental import pallas as pl
from jax.experimental.pallas import tpu as pltpu

# ---- small synthetic config (consistent with the module) ----
B = 2              # batch
L = 16             # sequence length
E = 64             # input_embed_dim
C = 32             # output_channels per conv branch
KS = (3, 5, 7)     # kernel sizes
KMAX = max(KS)
M = C * len(KS)    # mid_channels = 96
H = 4              # num_heads
D = M // H         # true head dim = 24 (attention scaling uses this)
DP = 32            # lane-aligned (padded) head dim
MP = H * DP        # lane-aligned (padded) channel dim = 128
PAD = (KMAX - 1) // 2          # host-side zero padding on the sequence axis (=3)
LP_AL = 24                     # padded sequence rows, rounded to a sublane multiple


def textcnn_kernel(x_ref, wc_ref, bc_ref, pe_ref,
                   wqkv_ref, bqkv_ref, wo_ref, bo_ref, out_ref):
    """One batch element: fused conv + ReLU + PE + multi-head self-attention."""
    x = x_ref[...]                                   # (LP_AL, E), zero padded

    # --- fused Conv1d branches (k = 3/5/7, 'same' padding) ---
    # One per-tap matmul against the stacked (E, MP) weight; branch channels
    # land directly at lanes 0:32 / 32:64 / 64:96, lanes 96:128 stay zero.
    acc = jnp.zeros((L, MP), jnp.float32)
    for tap in range(KMAX):                          # static unroll, 7 taps
        acc = acc + jnp.dot(x[tap:tap + L, :], wc_ref[tap],
                            preferred_element_type=jnp.float32)
    feat = jnp.maximum(acc + bc_ref[...], 0.0)       # ReLU

    # dropout(p=0.4): identity in eval mode
    # TODO(synk): training-mode dropout (RNG mask) intentionally not implemented.
    feat = feat + pe_ref[...]                        # sinusoidal PE (zero in pad lanes)

    # --- nn.MultiheadAttention(mid_channels, num_heads, batch_first=True) ---
    qkv = jnp.dot(feat, wqkv_ref[...],
                  preferred_element_type=jnp.float32) + bqkv_ref[...]   # (L, 3*MP)
    q = qkv[:, 0:MP]
    k = qkv[:, MP:2 * MP]
    v = qkv[:, 2 * MP:3 * MP]

    scale = 1.0 / math.sqrt(D)                       # scale with the TRUE head dim (24)
    head_outs = []
    for h in range(H):                               # static unroll, 32-lane-aligned slices
        sl = slice(h * DP, (h + 1) * DP)
        qh, kh, vh = q[:, sl], k[:, sl], v[:, sl]    # padded lanes are exactly zero
        s = jnp.dot(qh, kh.T, preferred_element_type=jnp.float32) * scale   # (L, L)
        s = s - jnp.max(s, axis=-1, keepdims=True)
        p = jnp.exp(s)
        p = p * pl.reciprocal(jnp.sum(p, axis=-1, keepdims=True), approx=True)
        head_outs.append(jnp.dot(p, vh, preferred_element_type=jnp.float32))
    attn = jnp.concatenate(head_outs, axis=-1)       # (L, MP), aligned lane offsets

    out = jnp.dot(attn, wo_ref[...], preferred_element_type=jnp.float32) + bo_ref[...]
    out_ref[...] = out.astype(out_ref.dtype)         # full 128-lane (unmasked) store


def pack_params(w3, b3, w5, b5, w7, b7, pe, wq, bq, wk, bk, wv, bv, wo, bo):
    """Host-side fusion / zero-padding of the per-layer weights for the kernel.

    - conv weights (k, E, C) -> one stacked (7, E, MP) weight (zero taps for
      the shorter branches, zero lanes 96:128) + one (1, MP) bias.
    - Wq/Wk/Wv (M, M) -> one (MP, 3*MP) weight: each head's 24 columns placed
      at lane offset h*32 (zero-padded to 32); matching (1, 3*MP) bias.
    - Wo (M, M) -> (MP, MP): head-interleaved rows, trailing-zero columns.
    - pe (L, M) -> (L, MP) trailing-zero padded.
    Padded rows/columns are all zero, so the math is bit-for-bit the unpadded
    computation (up to fp accumulation order).
    """
    wc = jnp.zeros((KMAX, E, MP), jnp.float32)
    bc = jnp.zeros((1, MP), jnp.float32)
    for w, bias, k, col in ((w3, b3, 3, 0), (w5, b5, 5, C), (w7, b7, 7, 2 * C)):
        p = (k - 1) // 2
        wc = wc.at[PAD - p:PAD - p + k, :, col:col + C].set(w)
        bc = bc.at[:, col:col + C].set(bias)

    pe_p = jnp.zeros((L, MP), jnp.float32).at[:, :M].set(pe)

    wqkv = jnp.zeros((MP, 3 * MP), jnp.float32)
    bqkv = jnp.zeros((1, 3 * MP), jnp.float32)
    for i, (w, bias) in enumerate(((wq, bq), (wk, bk), (wv, bv))):
        for h in range(H):
            dst = i * MP + h * DP
            wqkv = wqkv.at[:M, dst:dst + D].set(w[:, h * D:(h + 1) * D])
            bqkv = bqkv.at[:, dst:dst + D].set(bias[:, h * D:(h + 1) * D])

    wo_p = jnp.zeros((MP, MP), jnp.float32)
    for h in range(H):
        wo_p = wo_p.at[h * DP:h * DP + D, :M].set(wo[h * D:(h + 1) * D, :])
    bo_p = jnp.zeros((1, MP), jnp.float32).at[:, :M].set(bo)

    return (wc, bc, pe_p, wqkv, bqkv, wo_p, bo_p)


def textcnn_forward(x, attention_mask, packed):
    """x: (B, L, E) float32.  attention_mask is unused (matches reference forward)."""
    del attention_mask
    wc, bc, pe_p, wqkv, bqkv, wo_p, bo_p = packed
    x_pad = jnp.pad(x, ((0, 0), (PAD, LP_AL - L - PAD), (0, 0)))

    def full(shape):
        return pl.BlockSpec(shape, lambda b, _n=len(shape): (0,) * _n)

    in_specs = [
        pl.BlockSpec((None, LP_AL, E), lambda b: (b, 0, 0)),  # x (per-batch block)
        full((KMAX, E, MP)), full((1, MP)),                   # fused conv weight / bias
        full((L, MP)),                                        # positional encoding (padded)
        full((MP, 3 * MP)), full((1, 3 * MP)),                # fused QKV weight / bias
        full((MP, MP)), full((1, MP)),                        # out-proj weight / bias
    ]
    out_spec = pl.BlockSpec((None, L, MP), lambda b: (b, 0, 0))

    flops_per_b = (2 * L * E * MP * KMAX            # fused conv taps
                   + 2 * L * MP * (3 * MP)          # fused QKV projection
                   + H * 2 * (2 * L * L * DP)       # attention scores + values
                   + 2 * L * MP * MP)               # output projection
    bytes_accessed = 4 * (B * LP_AL * E + KMAX * E * MP + MP + L * MP
                          + MP * 3 * MP + 3 * MP + MP * MP + MP + B * L * MP)
    cost = pl.CostEstimate(flops=B * flops_per_b,
                           transcendentals=B * H * L * (L + 1),
                           bytes_accessed=bytes_accessed)

    out_padded = pl.pallas_call(
        textcnn_kernel,
        out_shape=jax.ShapeDtypeStruct((B, L, MP), jnp.float32),
        grid_spec=pltpu.PrefetchScalarGridSpec(
            num_scalar_prefetch=0,
            grid=(B,),
            in_specs=in_specs,
            out_specs=out_spec,
        ),
        compiler_params=pltpu.CompilerParams(
            dimension_semantics=("parallel",)),     # batch elems independent (v7x 2-TC)
        cost_estimate=cost,
    )(x_pad, wc, bc, pe_p, wqkv, bqkv, wo_p, bo_p)

    return out_padded[:, :, :M]                     # drop the zero pad lanes -> (B, L, 96)


def sinusoidal_pe(length, d_model):
    pos = jnp.arange(length, dtype=jnp.float32)[:, None]
    div = jnp.exp(jnp.arange(0, d_model, 2, dtype=jnp.float32)
                  * (-math.log(10000.0) / d_model))
    pe = jnp.zeros((length, d_model), jnp.float32)
    pe = pe.at[:, 0::2].set(jnp.sin(pos * div))
    pe = pe.at[:, 1::2].set(jnp.cos(pos * div))
    return pe


def reference_forward(x, params):
    """Plain-JAX reference with the original (unfused, unpadded) math."""
    (w3, b3, w5, b5, w7, b7, pe, wq, bq, wk, bk, wv, bv, wo, bo) = params
    x_pad = jnp.pad(x, ((0, 0), (PAD, PAD), (0, 0)))
    outs = []
    for b in range(B):
        xb = x_pad[b]
        feats = []
        for w, bias, k in ((w3, b3, 3), (w5, b5, 5), (w7, b7, 7)):
            p = (k - 1) // 2
            acc = jnp.zeros((L, C), jnp.float32)
            for tap in range(k):
                off = PAD - p + tap
                acc = acc + xb[off:off + L, :] @ w[tap]
            feats.append(jnp.maximum(acc + bias, 0.0))
        feat = jnp.concatenate(feats, axis=-1) + pe
        q = feat @ wq + bq
        kk = feat @ wk + bk
        v = feat @ wv + bv
        heads = []
        for h in range(H):
            sl = slice(h * D, (h + 1) * D)
            s = (q[:, sl] @ kk[:, sl].T) / math.sqrt(D)
            p_ = jax.nn.softmax(s, axis=-1)
            heads.append(p_ @ v[:, sl])
        attn = jnp.concatenate(heads, axis=-1)
        outs.append(attn @ wo + bo)
    return jnp.stack(outs, axis=0)


if __name__ == "__main__":
    key = jax.random.PRNGKey(0)
    ks = jax.random.split(key, 20)

    def init(k, shape, scale=0.05):
        return jax.random.normal(k, shape, jnp.float32) * scale

    # conv weights stored as (kernel_size, E, C)  == transposed PyTorch (C, E, k)
    w3, b3 = init(ks[0], (3, E, C)), init(ks[1], (1, C))
    w5, b5 = init(ks[2], (5, E, C)), init(ks[3], (1, C))
    w7, b7 = init(ks[4], (7, E, C)), init(ks[5], (1, C))
    pe = sinusoidal_pe(L, M)
    # MHA in_proj (stored pre-transposed: x @ W^T) and out_proj
    wq, bq = init(ks[6], (M, M)), init(ks[7], (1, M))
    wk, bk = init(ks[8], (M, M)), init(ks[9], (1, M))
    wv, bv = init(ks[10], (M, M)), init(ks[11], (1, M))
    wo, bo = init(ks[12], (M, M)), init(ks[13], (1, M))
    params = (w3, b3, w5, b5, w7, b7, pe, wq, bq, wk, bk, wv, bv, wo, bo)
    packed = pack_params(*params)

    x = jax.random.normal(ks[14], (B, L, E), jnp.float32)
    attention_mask = jnp.ones((B, L), jnp.int32)   # accepted but unused (as in reference)

    out = textcnn_forward(x, attention_mask, packed)
    out = jax.block_until_ready(out)

    ref = reference_forward(x, params)
    assert out.shape == (B, L, M), out.shape
    assert bool(jnp.all(jnp.isfinite(out)))
    assert bool(jnp.allclose(out, ref, atol=2e-2, rtol=2e-2)), \
        float(jnp.max(jnp.abs(out - ref)))

    print("KERNEL_OK")
</pallas_src>

<mosaic_0001>
module attributes {stable_mosaic.version = 11 : i64} {
  func.func @textcnn_kernel(%arg0: i32, %arg1: memref<1x24x64xf32, #tpu.memory_space<vmem>>, %arg2: memref<7x64x128xf32, #tpu.memory_space<vmem>>, %arg3: memref<1x128xf32, #tpu.memory_space<vmem>>, %arg4: memref<16x128xf32, #tpu.memory_space<vmem>>, %arg5: memref<128x384xf32, #tpu.memory_space<vmem>>, %arg6: memref<1x384xf32, #tpu.memory_space<vmem>>, %arg7: memref<128x128xf32, #tpu.memory_space<vmem>>, %arg8: memref<1x128xf32, #tpu.memory_space<vmem>>, %arg9: memref<1x16x128xf32, #tpu.memory_space<vmem>>) attributes {dimension_semantics = [#tpu.dimension_semantics<parallel>], iteration_bounds = array<i64: 2>, scalar_prefetch = 0 : i64, scratch_operands = 0 : i64, tpu.core_type = #tpu.core_type<tc>, window_params = [{transform_indices = @transform_0, window_bounds = array<i64: 1, 24, 64>}, {pipeline_mode = #tpu.pipeline_mode<synchronous>, transform_indices = @transform_1, window_bounds = array<i64: 7, 64, 128>}, {pipeline_mode = #tpu.pipeline_mode<synchronous>, transform_indices = @transform_2, window_bounds = array<i64: 1, 128>}, {pipeline_mode = #tpu.pipeline_mode<synchronous>, transform_indices = @transform_3, window_bounds = array<i64: 16, 128>}, {pipeline_mode = #tpu.pipeline_mode<synchronous>, transform_indices = @transform_4, window_bounds = array<i64: 128, 384>}, {pipeline_mode = #tpu.pipeline_mode<synchronous>, transform_indices = @transform_5, window_bounds = array<i64: 1, 384>}, {pipeline_mode = #tpu.pipeline_mode<synchronous>, transform_indices = @transform_6, window_bounds = array<i64: 128, 128>}, {pipeline_mode = #tpu.pipeline_mode<synchronous>, transform_indices = @transform_7, window_bounds = array<i64: 1, 128>}, {transform_indices = @transform_8, window_bounds = array<i64: 1, 16, 128>}]} {
    %c0 = arith.constant 0 : index
    %c0_0 = arith.constant 0 : index
    %c0_1 = arith.constant 0 : index
    %0 = vector.load %arg1[%c0, %c0_0, %c0_1] : memref<1x24x64xf32, #tpu.memory_space<vmem>>, vector<1x24x64xf32>
    %1 = vector.shape_cast %0 : vector<1x24x64xf32> to vector<24x64xf32>
    %cst = arith.constant 0.000000e+00 : f32
    %2 = vector.broadcast %cst : f32 to vector<16x128xf32>
    %3 = vector.extract_strided_slice %1 {offsets = [0, 0], sizes = [16, 64], strides = [1, 1]} : vector<24x64xf32> to vector<16x64xf32>
    %c0_2 = arith.constant 0 : index
    %c0_3 = arith.constant 0 : index
    %c0_4 = arith.constant 0 : index
    %4 = vector.load %arg2[%c0_2, %c0_3, %c0_4] : memref<7x64x128xf32, #tpu.memory_space<vmem>>, vector<1x64x128xf32>
    %5 = vector.shape_cast %4 : vector<1x64x128xf32> to vector<64x128xf32>
    %cst_5 = arith.constant dense<0.000000e+00> : vector<16x128xf32>
    %6 = tpu.matmul %3, %5, %cst_5 {dimension_numbers = #tpu.dot_dimension_numbers<[1], [0], [0], [1], [0, 0, 1, 1], [], []>} : vector<16x64xf32>, vector<64x128xf32>, vector<16x128xf32> -> vector<16x128xf32>
    %7 = arith.addf %2, %6 : vector<16x128xf32>
    %8 = vector.extract_strided_slice %1 {offsets = [1, 0], sizes = [16, 64], strides = [1, 1]} : vector<24x64xf32> to vector<16x64xf32>
    %c1 = arith.constant 1 : index
    %c0_6 = arith.constant 0 : index
    %c0_7 = arith.constant 0 : index
    %9 = vector.load %arg2[%c1, %c0_6, %c0_7] : memref<7x64x128xf32, #tpu.memory_space<vmem>>, vector<1x64x128xf32>
    %10 = vector.shape_cast %9 : vector<1x64x128xf32> to vector<64x128xf32>
    %cst_8 = arith.constant dense<0.000000e+00> : vector<16x128xf32>
    %11 = tpu.matmul %8, %10, %cst_8 {dimension_numbers = #tpu.dot_dimension_numbers<[1], [0], [0], [1], [0, 0, 1, 1], [], []>} : vector<16x64xf32>, vector<64x128xf32>, vector<16x128xf32> -> vector<16x128xf32>
    %12 = arith.addf %7, %11 : vector<16x128xf32>
    %13 = vector.extract_strided_slice %1 {offsets = [2, 0], sizes = [16, 64], strides = [1, 1]} : vector<24x64xf32> to vector<16x64xf32>
    %c2 = arith.constant 2 : index
    %c0_9 = arith.constant 0 : index
    %c0_10 = arith.constant 0 : index
    %14 = vector.load %arg2[%c2, %c0_9, %c0_10] : memref<7x64x128xf32, #tpu.memory_space<vmem>>, vector<1x64x128xf32>
    %15 = vector.shape_cast %14 : vector<1x64x128xf32> to vector<64x128xf32>
    %cst_11 = arith.constant dense<0.000000e+00> : vector<16x128xf32>
    %16 = tpu.matmul %13, %15, %cst_11 {dimension_numbers = #tpu.dot_dimension_numbers<[1], [0], [0], [1], [0, 0, 1, 1], [], []>} : vector<16x64xf32>, vector<64x128xf32>, vector<16x128xf32> -> vector<16x128xf32>
    %17 = arith.addf %12, %16 : vector<16x128xf32>
    %18 = vector.extract_strided_slice %1 {offsets = [3, 0], sizes = [16, 64], strides = [1, 1]} : vector<24x64xf32> to vector<16x64xf32>
    %c3 = arith.constant 3 : index
    %c0_12 = arith.constant 0 : index
    %c0_13 = arith.constant 0 : index
    %19 = vector.load %arg2[%c3, %c0_12, %c0_13] : memref<7x64x128xf32, #tpu.memory_space<vmem>>, vector<1x64x128xf32>
    %20 = vector.shape_cast %19 : vector<1x64x128xf32> to vector<64x128xf32>
    %cst_14 = arith.constant dense<0.000000e+00> : vector<16x128xf32>
    %21 = tpu.matmul %18, %20, %cst_14 {dimension_numbers = #tpu.dot_dimension_numbers<[1], [0], [0], [1], [0, 0, 1, 1], [], []>} : vector<16x64xf32>, vector<64x128xf32>, vector<16x128xf32> -> vector<16x128xf32>
    %22 = arith.addf %17, %21 : vector<16x128xf32>
    %23 = vector.extract_strided_slice %1 {offsets = [4, 0], sizes = [16, 64], strides = [1, 1]} : vector<24x64xf32> to vector<16x64xf32>
    %c4 = arith.constant 4 : index
    %c0_15 = arith.constant 0 : index
    %c0_16 = arith.constant 0 : index
    %24 = vector.load %arg2[%c4, %c0_15, %c0_16] : memref<7x64x128xf32, #tpu.memory_space<vmem>>, vector<1x64x128xf32>
    %25 = vector.shape_cast %24 : vector<1x64x128xf32> to vector<64x128xf32>
    %cst_17 = arith.constant dense<0.000000e+00> : vector<16x128xf32>
    %26 = tpu.matmul %23, %25, %cst_17 {dimension_numbers = #tpu.dot_dimension_numbers<[1], [0], [0], [1], [0, 0, 1, 1], [], []>} : vector<16x64xf32>, vector<64x128xf32>, vector<16x128xf32> -> vector<16x128xf32>
    %27 = arith.addf %22, %26 : vector<16x128xf32>
    %28 = vector.extract_strided_slice %1 {offsets = [5, 0], sizes = [16, 64], strides = [1, 1]} : vector<24x64xf32> to vector<16x64xf32>
    %c5 = arith.constant 5 : index
    %c0_18 = arith.constant 0 : index
    %c0_19 = arith.constant 0 : index
    %29 = vector.load %arg2[%c5, %c0_18, %c0_19] : memref<7x64x128xf32, #tpu.memory_space<vmem>>, vector<1x64x128xf32>
    %30 = vector.shape_cast %29 : vector<1x64x128xf32> to vector<64x128xf32>
    %cst_20 = arith.constant dense<0.000000e+00> : vector<16x128xf32>
    %31 = tpu.matmul %28, %30, %cst_20 {dimension_numbers = #tpu.dot_dimension_numbers<[1], [0], [0], [1], [0, 0, 1, 1], [], []>} : vector<16x64xf32>, vector<64x128xf32>, vector<16x128xf32> -> vector<16x128xf32>
    %32 = arith.addf %27, %31 : vector<16x128xf32>
    %33 = vector.extract_strided_slice %1 {offsets = [6, 0], sizes = [16, 64], strides = [1, 1]} : vector<24x64xf32> to vector<16x64xf32>
    %c6 = arith.constant 6 : index
    %c0_21 = arith.constant 0 : index
    %c0_22 = arith.constant 0 : index
    %34 = vector.load %arg2[%c6, %c0_21, %c0_22] : memref<7x64x128xf32, #tpu.memory_space<vmem>>, vector<1x64x128xf32>
    %35 = vector.shape_cast %34 : vector<1x64x128xf32> to vector<64x128xf32>
    %cst_23 = arith.constant dense<0.000000e+00> : vector<16x128xf32>
    %36 = tpu.matmul %33, %35, %cst_23 {dimension_numbers = #tpu.dot_dimension_numbers<[1], [0], [0], [1], [0, 0, 1, 1], [], []>} : vector<16x64xf32>, vector<64x128xf32>, vector<16x128xf32> -> vector<16x128xf32>
    %37 = arith.addf %32, %36 : vector<16x128xf32>
    %c0_24 = arith.constant 0 : index
    %c0_25 = arith.constant 0 : index
    %38 = vector.load %arg3[%c0_24, %c0_25] : memref<1x128xf32, #tpu.memory_space<vmem>>, vector<1x128xf32>
    %39 = vector.broadcast %38 : vector<1x128xf32> to vector<16x128xf32>
    %40 = arith.addf %37, %39 : vector<16x128xf32>
    %cst_26 = arith.constant 0.000000e+00 : f32
    %41 = vector.broadcast %cst_26 : f32 to vector<16x128xf32>
    %42 = arith.maximumf %40, %41 : vector<16x128xf32>
    %c0_27 = arith.constant 0 : index
    %c0_28 = arith.constant 0 : index
    %43 = vector.load %arg4[%c0_27, %c0_28] : memref<16x128xf32, #tpu.memory_space<vmem>>, vector<16x128xf32>
    %44 = arith.addf %42, %43 : vector<16x128xf32>
    %c0_29 = arith.constant 0 : index
    %c0_30 = arith.constant 0 : index
    %45 = vector.load %arg5[%c0_29, %c0_30] : memref<128x384xf32, #tpu.memory_space<vmem>>, vector<128x384xf32>
    %cst_31 = arith.constant dense<0.000000e+00> : vector<16x384xf32>
    %46 = tpu.matmul %44, %45, %cst_31 {dimension_numbers = #tpu.dot_dimension_numbers<[1], [0], [0], [1], [0, 0, 1, 1], [], []>} : vector<16x128xf32>, vector<128x384xf32>, vector<16x384xf32> -> vector<16x384xf32>
    %c0_32 = arith.constant 0 : index
    %c0_33 = arith.constant 0 : index
    %47 = vector.load %arg6[%c0_32, %c0_33] : memref<1x384xf32, #tpu.memory_space<vmem>>, vector<1x384xf32>
    %48 = vector.broadcast %47 : vector<1x384xf32> to vector<16x384xf32>
    %49 = arith.addf %46, %48 : vector<16x384xf32>
    %50 = vector.extract_strided_slice %49 {offsets = [0, 0], sizes = [16, 128], strides = [1, 1]} : vector<16x384xf32> to vector<16x128xf32>
    %51 = vector.extract_strided_slice %49 {offsets = [0, 128], sizes = [16, 128], strides = [1, 1]} : vector<16x384xf32> to vector<16x128xf32>
    %52 = vector.extract_strided_slice %49 {offsets = [0, 256], sizes = [16, 128], strides = [1, 1]} : vector<16x384xf32> to vector<16x128xf32>
    %53 = vector.extract_strided_slice %50 {offsets = [0, 0], sizes = [16, 32], strides = [1, 1]} : vector<16x128xf32> to vector<16x32xf32>
    %54 = vector.extract_strided_slice %51 {offsets = [0, 0], sizes = [16, 32], strides = [1, 1]} : vector<16x128xf32> to vector<16x32xf32>
    %55 = vector.extract_strided_slice %52 {offsets = [0, 0], sizes = [16, 32], strides = [1, 1]} : vector<16x128xf32> to vector<16x32xf32>
    %56 = tpu.transpose %54, [1, 0] : vector<16x32xf32> -> vector<32x16xf32>
    %cst_34 = arith.constant dense<0.000000e+00> : vector<16x16xf32>
    %57 = tpu.matmul %53, %56, %cst_34 {dimension_numbers = #tpu.dot_dimension_numbers<[1], [0], [0], [1], [0, 0, 1, 1], [], []>} : vector<16x32xf32>, vector<32x16xf32>, vector<16x16xf32> -> vector<16x16xf32>
    %cst_35 = arith.constant 0.204124153 : f32
    %58 = vector.broadcast %cst_35 : f32 to vector<16x16xf32>
    %59 = arith.mulf %57, %58 : vector<16x16xf32>
    %cst_36 = arith.constant dense<0xFF800000> : vector<16xf32>
    %60 = vector.multi_reduction <maximumf>, %59, %cst_36 [1] : vector<16x16xf32> to vector<16xf32>
    %61 = vector.shape_cast %60 : vector<16xf32> to vector<16x1xf32>
    %62 = vector.broadcast %61 : vector<16x1xf32> to vector<16x16xf32>
    %63 = arith.subf %59, %62 : vector<16x16xf32>
    %64 = math.exp %63 : vector<16x16xf32>
    %cst_37 = arith.constant dense<0.000000e+00> : vector<16xf32>
    %65 = vector.multi_reduction <add>, %64, %cst_37 [1] : vector<16x16xf32> to vector<16xf32>
    %66 = vector.shape_cast %65 : vector<16xf32> to vector<16x1xf32>
    %67 = tpu.reciprocal %66 {approx = true} : vector<16x1xf32> -> vector<16x1xf32>
    %68 = vector.broadcast %67 : vector<16x1xf32> to vector<16x16xf32>
    %69 = arith.mulf %64, %68 : vector<16x16xf32>
    %cst_38 = arith.constant dense<0.000000e+00> : vector<16x32xf32>
    %70 = tpu.matmul %69, %55, %cst_38 {dimension_numbers = #tpu.dot_dimension_numbers<[1], [0], [0], [1], [0, 0, 1, 1], [], []>} : vector<16x16xf32>, vector<16x32xf32>, vector<16x32xf32> -> vector<16x32xf32>
    %71 = vector.extract_strided_slice %50 {offsets = [0, 32], sizes = [16, 32], strides = [1, 1]} : vector<16x128xf32> to vector<16x32xf32>
    %72 = vector.extract_strided_slice %51 {offsets = [0, 32], sizes = [16, 32], strides = [1, 1]} : vector<16x128xf32> to vector<16x32xf32>
    %73 = vector.extract_strided_slice %52 {offsets = [0, 32], sizes = [16, 32], strides = [1, 1]} : vector<16x128xf32> to vector<16x32xf32>
    %74 = tpu.transpose %72, [1, 0] : vector<16x32xf32> -> vector<32x16xf32>
    %cst_39 = arith.constant dense<0.000000e+00> : vector<16x16xf32>
    %75 = tpu.matmul %71, %74, %cst_39 {dimension_numbers = #tpu.dot_dimension_numbers<[1], [0], [0], [1], [0, 0, 1, 1], [], []>} : vector<16x32xf32>, vector<32x16xf32>, vector<16x16xf32> -> vector<16x16xf32>
    %cst_40 = arith.constant 0.204124153 : f32
    %76 = vector.broadcast %cst_40 : f32 to vector<16x16xf32>
    %77 = arith.mulf %75, %76 : vector<16x16xf32>
    %cst_41 = arith.constant dense<0xFF800000> : vector<16xf32>
    %78 = vector.multi_reduction <maximumf>, %77, %cst_41 [1] : vector<16x16xf32> to vector<16xf32>
    %79 = vector.shape_cast %78 : vector<16xf32> to vector<16x1xf32>
    %80 = vector.broadcast %79 : vector<16x1xf32> to vector<16x16xf32>
    %81 = arith.subf %77, %80 : vector<16x16xf32>
    %82 = math.exp %81 : vector<16x16xf32>
    %cst_42 = arith.constant dense<0.000000e+00> : vector<16xf32>
    %83 = vector.multi_reduction <add>, %82, %cst_42 [1] : vector<16x16xf32> to vector<16xf32>
    %84 = vector.shape_cast %83 : vector<16xf32> to vector<16x1xf32>
    %85 = tpu.reciprocal %84 {approx = true} : vector<16x1xf32> -> vector<16x1xf32>
    %86 = vector.broadcast %85 : vector<16x1xf32> to vector<16x16xf32>
    %87 = arith.mulf %82, %86 : vector<16x16xf32>
    %cst_43 = arith.constant dense<0.000000e+00> : vector<16x32xf32>
    %88 = tpu.matmul %87, %73, %cst_43 {dimension_numbers = #tpu.dot_dimension_numbers<[1], [0], [0], [1], [0, 0, 1, 1], [], []>} : vector<16x16xf32>, vector<16x32xf32>, vector<16x32xf32> -> vector<16x32xf32>
    %89 = vector.extract_strided_slice %50 {offsets = [0, 64], sizes = [16, 32], strides = [1, 1]} : vector<16x128xf32> to vector<16x32xf32>
    %90 = vector.extract_strided_slice %51 {offsets = [0, 64], sizes = [16, 32], strides = [1, 1]} : vector<16x128xf32> to vector<16x32xf32>
    %91 = vector.extract_strided_slice %52 {offsets = [0, 64], sizes = [16, 32], strides = [1, 1]} : vector<16x128xf32> to vector<16x32xf32>
    %92 = tpu.transpose %90, [1, 0] : vector<16x32xf32> -> vector<32x16xf32>
    %cst_44 = arith.constant dense<0.000000e+00> : vector<16x16xf32>
    %93 = tpu.matmul %89, %92, %cst_44 {dimension_numbers = #tpu.dot_dimension_numbers<[1], [0], [0], [1], [0, 0, 1, 1], [], []>} : vector<16x32xf32>, vector<32x16xf32>, vector<16x16xf32> -> vector<16x16xf32>
    %cst_45 = arith.constant 0.204124153 : f32
    %94 = vector.broadcast %cst_45 : f32 to vector<16x16xf32>
    %95 = arith.mulf %93, %94 : vector<16x16xf32>
    %cst_46 = arith.constant dense<0xFF800000> : vector<16xf32>
    %96 = vector.multi_reduction <maximumf>, %95, %cst_46 [1] : vector<16x16xf32> to vector<16xf32>
    %97 = vector.shape_cast %96 : vector<16xf32> to vector<16x1xf32>
    %98 = vector.broadcast %97 : vector<16x1xf32> to vector<16x16xf32>
    %99 = arith.subf %95, %98 : vector<16x16xf32>
    %100 = math.exp %99 : vector<16x16xf32>
    %cst_47 = arith.constant dense<0.000000e+00> : vector<16xf32>
    %101 = vector.multi_reduction <add>, %100, %cst_47 [1] : vector<16x16xf32> to vector<16xf32>
    %102 = vector.shape_cast %101 : vector<16xf32> to vector<16x1xf32>
    %103 = tpu.reciprocal %102 {approx = true} : vector<16x1xf32> -> vector<16x1xf32>
    %104 = vector.broadcast %103 : vector<16x1xf32> to vector<16x16xf32>
    %105 = arith.mulf %100, %104 : vector<16x16xf32>
    %cst_48 = arith.constant dense<0.000000e+00> : vector<16x32xf32>
    %106 = tpu.matmul %105, %91, %cst_48 {dimension_numbers = #tpu.dot_dimension_numbers<[1], [0], [0], [1], [0, 0, 1, 1], [], []>} : vector<16x16xf32>, vector<16x32xf32>, vector<16x32xf32> -> vector<16x32xf32>
    %107 = vector.extract_strided_slice %50 {offsets = [0, 96], sizes = [16, 32], strides = [1, 1]} : vector<16x128xf32> to vector<16x32xf32>
    %108 = vector.extract_strided_slice %51 {offsets = [0, 96], sizes = [16, 32], strides = [1, 1]} : vector<16x128xf32> to vector<16x32xf32>
    %109 = vector.extract_strided_slice %52 {offsets = [0, 96], sizes = [16, 32], strides = [1, 1]} : vector<16x128xf32> to vector<16x32xf32>
    %110 = tpu.transpose %108, [1, 0] : vector<16x32xf32> -> vector<32x16xf32>
    %cst_49 = arith.constant dense<0.000000e+00> : vector<16x16xf32>
    %111 = tpu.matmul %107, %110, %cst_49 {dimension_numbers = #tpu.dot_dimension_numbers<[1], [0], [0], [1], [0, 0, 1, 1], [], []>} : vector<16x32xf32>, vector<32x16xf32>, vector<16x16xf32> -> vector<16x16xf32>
    %cst_50 = arith.constant 0.204124153 : f32
    %112 = vector.broadcast %cst_50 : f32 to vector<16x16xf32>
    %113 = arith.mulf %111, %112 : vector<16x16xf32>
    %cst_51 = arith.constant dense<0xFF800000> : vector<16xf32>
    %114 = vector.multi_reduction <maximumf>, %113, %cst_51 [1] : vector<16x16xf32> to vector<16xf32>
    %115 = vector.shape_cast %114 : vector<16xf32> to vector<16x1xf32>
    %116 = vector.broadcast %115 : vector<16x1xf32> to vector<16x16xf32>
    %117 = arith.subf %113, %116 : vector<16x16xf32>
    %118 = math.exp %117 : vector<16x16xf32>
    %cst_52 = arith.constant dense<0.000000e+00> : vector<16xf32>
    %119 = vector.multi_reduction <add>, %118, %cst_52 [1] : vector<16x16xf32> to vector<16xf32>
    %120 = vector.shape_cast %119 : vector<16xf32> to vector<16x1xf32>
    %121 = tpu.reciprocal %120 {approx = true} : vector<16x1xf32> -> vector<16x1xf32>
    %122 = vector.broadcast %121 : vector<16x1xf32> to vector<16x16xf32>
    %123 = arith.mulf %118, %122 : vector<16x16xf32>
    %cst_53 = arith.constant dense<0.000000e+00> : vector<16x32xf32>
    %124 = tpu.matmul %123, %109, %cst_53 {dimension_numbers = #tpu.dot_dimension_numbers<[1], [0], [0], [1], [0, 0, 1, 1], [], []>} : vector<16x16xf32>, vector<16x32xf32>, vector<16x32xf32> -> vector<16x32xf32>
    %125 = tpu.concatenate %70, %88, %106, %124 in 1 : vector<16x32xf32>, vector<16x32xf32>, vector<16x32xf32>, vector<16x32xf32> -> vector<16x128xf32>
    %c0_54 = arith.constant 0 : index
    %c0_55 = arith.constant 0 : index
    %126 = vector.load %arg7[%c0_54, %c0_55] : memref<128x128xf32, #tpu.memory_space<vmem>>, vector<128x128xf32>
    %cst_56 = arith.constant dense<0.000000e+00> : vector<16x128xf32>
    %127 = tpu.matmul %125, %126, %cst_56 {dimension_numbers = #tpu.dot_dimension_numbers<[1], [0], [0], [1], [0, 0, 1, 1], [], []>} : vector<16x128xf32>, vector<128x128xf32>, vector<16x128xf32> -> vector<16x128xf32>
    %c0_57 = arith.constant 0 : index
    %c0_58 = arith.constant 0 : index
    %128 = vector.load %arg8[%c0_57, %c0_58] : memref<1x128xf32, #tpu.memory_space<vmem>>, vector<1x128xf32>
    %129 = vector.broadcast %128 : vector<1x128xf32> to vector<16x128xf32>
    %130 = arith.addf %127, %129 : vector<16x128xf32>
    %c0_59 = arith.constant 0 : index
    %c0_60 = arith.constant 0 : index
    %c0_61 = arith.constant 0 : index
    %131 = vector.load %arg9[%c0_59, %c0_60, %c0_61] : memref<1x16x128xf32, #tpu.memory_space<vmem>>, vector<1x16x128xf32>
    %132 = vector.shape_cast %131 : vector<1x16x128xf32> to vector<16x128xf32>
    %133 = vector.shape_cast %130 : vector<16x128xf32> to vector<1x16x128xf32>
    tpu.vector_store %arg9[%c0_59, %c0_60, %c0_61], %133 {strides = array<i32>} : memref<1x16x128xf32, #tpu.memory_space<vmem>>, vector<1x16x128xf32>,
    return
  }
  func.func @transform_0(%arg0: i32) -> (i32, i32, i32) {
    %c0_i32 = arith.constant 0 : i32
    %c0_i32_0 = arith.constant 0 : i32
    %c0_i32_1 = arith.constant 0 : i32
    return %arg0, %c0_i32, %c0_i32_0 : i32, i32, i32
  }
  func.func @transform_1(%arg0: i32) -> (i32, i32, i32) {
    %c0_i32 = arith.constant 0 : i32
    %c0_i32_0 = arith.constant 0 : i32
    %c0_i32_1 = arith.constant 0 : i32
    %c0_i32_2 = arith.constant 0 : i32
    return %c0_i32, %c0_i32_0, %c0_i32_1 : i32, i32, i32
  }
  func.func @transform_2(%arg0: i32) -> (i32, i32) {
    %c0_i32 = arith.constant 0 : i32
    %c0_i32_0 = arith.constant 0 : i32
    %c0_i32_1 = arith.constant 0 : i32
    return %c0_i32, %c0_i32_0 : i32, i32
  }
  func.func @transform_3(%arg0: i32) -> (i32, i32) {
    %c0_i32 = arith.constant 0 : i32
    %c0_i32_0 = arith.constant 0 : i32
    %c0_i32_1 = arith.constant 0 : i32
    return %c0_i32, %c0_i32_0 : i32, i32
  }
  func.func @transform_4(%arg0: i32) -> (i32, i32) {
    %c0_i32 = arith.constant 0 : i32
    %c0_i32_0 = arith.constant 0 : i32
    %c0_i32_1 = arith.constant 0 : i32
    return %c0_i32, %c0_i32_0 : i32, i32
  }
  func.func @transform_5(%arg0: i32) -> (i32, i32) {
    %c0_i32 = arith.constant 0 : i32
    %c0_i32_0 = arith.constant 0 : i32
    %c0_i32_1 = arith.constant 0 : i32
    return %c0_i32, %c0_i32_0 : i32, i32
  }
  func.func @transform_6(%arg0: i32) -> (i32, i32) {
    %c0_i32 = arith.constant 0 : i32
    %c0_i32_0 = arith.constant 0 : i32
    %c0_i32_1 = arith.constant 0 : i32
    return %c0_i32, %c0_i32_0 : i32, i32
  }
  func.func @transform_7(%arg0: i32) -> (i32, i32) {
    %c0_i32 = arith.constant 0 : i32
    %c0_i32_0 = arith.constant 0 : i32
    %c0_i32_1 = arith.constant 0 : i32
    return %c0_i32, %c0_i32_0 : i32, i32
  }
  func.func @transform_8(%arg0: i32) -> (i32, i32, i32) {
    %c0_i32 = arith.constant 0 : i32
    %c0_i32_0 = arith.constant 0 : i32
    %c0_i32_1 = arith.constant 0 : i32
    return %arg0, %c0_i32, %c0_i32_0 : i32, i32, i32
  }
}

</mosaic_0001>

<llo_original>
// kernel: tpu_custom_call.1
$region0: #{tpu_custom_call.1}
  #allocation0 [shape = 'u32[]', space=smem, size = 0x4, offset = 0x4, fixed_abs, tag = 'smem constant byte address 0x4 - core index']
  #allocation1 [shape = 'u32[72,128]{1,0:T(1,128)}', space=vmem, size = 0x9000, scoped, tag = 'internal scratch']
  %s0 = inlined_call_operand.hbm [shape: f32[2,24,64], index: 0, kind: input, shape index: {}]
  %s1 = inlined_call_operand.hbm [shape: f32[7,64,128], index: 1, kind: input, shape index: {}]
  %s2 = inlined_call_operand.vmem [shape: f32[1,128], index: 2, kind: input, shape index: {}]
  %s3 = inlined_call_operand.hbm [shape: f32[16,128], index: 3, kind: input, shape index: {}]
  %s4 = inlined_call_operand.hbm [shape: f32[128,384], index: 4, kind: input, shape index: {}]
  %s5 = inlined_call_operand.vmem [shape: f32[1,384], index: 5, kind: input, shape index: {}]
  %s6 = inlined_call_operand.hbm [shape: f32[128,128], index: 6, kind: input, shape index: {}]
  %s7 = inlined_call_operand.vmem [shape: f32[1,128], index: 7, kind: input, shape index: {}]
  %s8 = inlined_call_operand.hbm [shape: f32[2,16,128], index: 8, kind: output, shape index: {}]
  %s9 = sld [smem:[#allocation0]]
  $region85: #{tpu_custom_call.1} parent=0
    _
  %s11 = ssub.s32 1, %s9
  %s12 = scalar_select 0, %s11, %s9
  $region1: #{tpu_custom_call.1} parent=0
    #allocation2 [shape = 'u8[24576]{0}', space=vmem, size = 0x6000, scoped, tag = 'input window, operand 0']
    #allocation3 [shape = 's32[2]{0}', space=sflag, size = 0x8, scoped, tag = 'scoped memory for tpu_custom_call.1']
    #allocation4 [shape = 's32[2]{0}', space=sflag, size = 0x8, scoped, tag = 'scoped memory for tpu_custom_call.1']
    #allocation5 [shape = 'u8[229376]{0}', space=vmem, size = 0x38000, scoped, tag = 'input window, operand 1, single buffered']
    #allocation6 [shape = 's32[1]{0}', space=sflag, size = 0x4, scoped, tag = 'scoped memory for tpu_custom_call.1']
    #allocation7 [shape = 'u8[8192]{0}', space=vmem, size = 0x2000, scoped, tag = 'input window, operand 3, single buffered']
    #allocation8 [shape = 'u8[196608]{0}', space=vmem, size = 0x30000, scoped, tag = 'input window, operand 4, single buffered']
    #allocation9 [shape = 's32[1]{0}', space=sflag, size = 0x4, scoped, tag = 'scoped memory for tpu_custom_call.1']
    #allocation10 [shape = 'u8[65536]{0}', space=vmem, size = 0x10000, scoped, tag = 'input window, operand 6, single buffered']
    #allocation11 [shape = 'u8[16384]{0}', space=vmem, size = 0x4000, scoped, tag = 'output window, operand 0']
    %13 = vsyncpa [#allocation3], 0
    %s14 = scalar_lea.sflag [#allocation3], 1
    %15 = vsyncpa %s14, 0
    %16 = vsyncpa [#allocation6], 0
    %17 = vsyncpa [#allocation9], 0
    %18 = vsyncpa [#allocation4], 0
    %s19 = scalar_lea.sflag [#allocation4], 1
    %20 = vsyncpa %s19, 0
    loop: start=0, step=1, limit=4
    $region2: #{tpu_custom_call.1} parent=1 // loop_pre_header
      _
    $region3: #{tpu_custom_call.1} parent=1 // loop_header
      %s22 = sphi 0, %s26
      %p23 = scmp.ge.s32.totalorder %s22, 4
      %s32 = sphi 0, %s34
      %s35 = sphi 0, %s32
      %s36 = sphi 0, %s35
      %s52 = sphi 0, %s36
      %s56 = sphi 0, %s56
      %s58 = sphi 0, %s56
      %s59 = sphi 0, %s58
      %s73 = sphi 0, %s59
      %s77 = sphi 0, %s77
      %s79 = sphi 0, %s77
      %s80 = sphi 0, %s79
      %s94 = sphi 0, %s80
      %s98 = sphi 0, %s98
      %s100 = sphi 0, %s98
      %s101 = sphi 0, %s100
      %s115 = sphi 0, %s101
      %s119 = sphi 0, %s119
      %s121 = sphi 0, %s119
      %s122 = sphi 0, %s121
      %s136 = sphi 0, %s122
      %s140 = sphi 0, %s140
      %s142 = sphi 0, %s140
      %s143 = sphi 0, %s142
      %s157 = sphi 0, %s143
      %s161 = sphi 0, %s161
      %s163 = sphi 0, %s161
      %s164 = sphi 0, %s163
      %s178 = sphi 0, %s164
      %s182 = sphi 0, %s182
      %s184 = sphi 0, %s182
      %s185 = sphi 0, %s184
      %s199 = sphi 0, %s185
      %s205 = sphi 0, %s207
      %s208 = sphi 0, %s205
      %s209 = sphi 0, %s208
      %s225 = sphi 0, %s209
    $region4: #{tpu_custom_call.1} parent=1 // loop_header_branch
      %25 = sbr.rel (%p23) target = $region8
    $region5: #{tpu_custom_call.1} parent=1 // loop_body
      %s27 = ssub.s32 %s22, 1
      %s28 = ssub.s32 %s22, 2
      %s29 = sadd.s32 %s22, 1
      %s30 = ssub.s32 %s22, %s29
      %p31 = scmp.eq.s32.totalorder %s30, 0
      %s33 = sadd.s32 %s32, 1
      %s34 = scalar_select %p31, %s32, %s33
      %p37 = pneg %p31
      %p38 = scmp.eq.s32.totalorder %s22, 1
      %p39 = por %p37, %p38
      %p40 = scmp.ne.s32.totalorder %s32, %s35
      %p41 = scmp.eq.s32.totalorder %s22, 0
      %p42 = por %p40, %p41
      %p43 = scmp.ne.s32.totalorder %s32, %s35
      %p44 = scmp.eq.s32.totalorder %s27, 1
      %p45 = por %p43, %p44
      %p46 = scmp.ne.s32.totalorder %s35, %s36
      %p47 = scmp.eq.s32.totalorder %s27, 0
      %p48 = por %p46, %p47
      %p49 = scmp.ne.s32.totalorder %s35, %s36
      %p50 = scmp.eq.s32.totalorder %s28, 1
      %p51 = por %p49, %p50
      %p53 = scmp.ne.s32.totalorder %s36, %s52
      %p54 = scmp.eq.s32.totalorder %s28, 0
      %p55 = por %p53, %p54
      %s57 = sadd.s32 %s56, 1
      %p60 = scmp.eq.s32.totalorder %s22, 1
      %p61 = scmp.ne.s32.totalorder %s56, %s58
      %p62 = scmp.eq.s32.totalorder %s22, 0
      %p63 = por %p61, %p62
      %p64 = scmp.ne.s32.totalorder %s56, %s58
      %p65 = scmp.eq.s32.totalorder %s27, 1
      %p66 = por %p64, %p65
      %p67 = scmp.ne.s32.totalorder %s58, %s59
      %p68 = scmp.eq.s32.totalorder %s27, 0
      %p69 = por %p67, %p68
      %p70 = scmp.ne.s32.totalorder %s58, %s59
      %p71 = scmp.eq.s32.totalorder %s28, 1
      %p72 = por %p70, %p71
      %p74 = scmp.ne.s32.totalorder %s59, %s73
      %p75 = scmp.eq.s32.totalorder %s28, 0
      %p76 = por %p74, %p75
      %s78 = sadd.s32 %s77, 1
      %p81 = scmp.eq.s32.totalorder %s22, 1
      %p82 = scmp.ne.s32.totalorder %s77, %s79
      %p83 = scmp.eq.s32.totalorder %s22, 0
      %p84 = por %p82, %p83
      %p85 = scmp.ne.s32.totalorder %s77, %s79
      %p86 = scmp.eq.s32.totalorder %s27, 1
      %p87 = por %p85, %p86
      %p88 = scmp.ne.s32.totalorder %s79, %s80
      %p89 = scmp.eq.s32.totalorder %s27, 0
      %p90 = por %p88, %p89
      %p91 = scmp.ne.s32.totalorder %s79, %s80
      %p92 = scmp.eq.s32.totalorder %s28, 1
      %p93 = por %p91, %p92
      %p95 = scmp.ne.s32.totalorder %s80, %s94
      %p96 = scmp.eq.s32.totalorder %s28, 0
      %p97 = por %p95, %p96
      %s99 = sadd.s32 %s98, 1
      %p102 = scmp.eq.s32.totalorder %s22, 1
      %p103 = scmp.ne.s32.totalorder %s98, %s100
      %p104 = scmp.eq.s32.totalorder %s22, 0
      %p105 = por %p103, %p104
      %p106 = scmp.ne.s32.totalorder %s98, %s100
      %p107 = scmp.eq.s32.totalorder %s27, 1
      %p108 = por %p106, %p107
      %p109 = scmp.ne.s32.totalorder %s100, %s101
      %p110 = scmp.eq.s32.totalorder %s27, 0
      %p111 = por %p109, %p110
      %p112 = scmp.ne.s32.totalorder %s100, %s101
      %p113 = scmp.eq.s32.totalorder %s28, 1
      %p114 = por %p112, %p113
      %p116 = scmp.ne.s32.totalorder %s101, %s115
      %p117 = scmp.eq.s32.totalorder %s28, 0
      %p118 = por %p116, %p117
      %s120 = sadd.s32 %s119, 1
      %p123 = scmp.eq.s32.totalorder %s22, 1
      %p124 = scmp.ne.s32.totalorder %s119, %s121
      %p125 = scmp.eq.s32.totalorder %s22, 0
      %p126 = por %p124, %p125
      %p127 = scmp.ne.s32.totalorder %s119, %s121
      %p128 = scmp.eq.s32.totalorder %s27, 1
      %p129 = por %p127, %p128
      %p130 = scmp.ne.s32.totalorder %s121, %s122
      %p131 = scmp.eq.s32.totalorder %s27, 0
      %p132 = por %p130, %p131
      %p133 = scmp.ne.s32.totalorder %s121, %s122
      %p134 = scmp.eq.s32.totalorder %s28, 1
      %p135 = por %p133, %p134
      %p137 = scmp.ne.s32.totalorder %s122, %s136
      %p138 = scmp.eq.s32.totalorder %s28, 0
      %p139 = por %p137, %p138
      %s141 = sadd.s32 %s140, 1
      %p144 = scmp.eq.s32.totalorder %s22, 1
      %p145 = scmp.ne.s32.totalorder %s140, %s142
      %p146 = scmp.eq.s32.totalorder %s22, 0
      %p147 = por %p145, %p146
      %p148 = scmp.ne.s32.totalorder %s140, %s142
      %p149 = scmp.eq.s32.totalorder %s27, 1
      %p150 = por %p148, %p149
      %p151 = scmp.ne.s32.totalorder %s142, %s143
      %p152 = scmp.eq.s32.totalorder %s27, 0
      %p153 = por %p151, %p152
      %p154 = scmp.ne.s32.totalorder %s142, %s143
      %p155 = scmp.eq.s32.totalorder %s28, 1
      %p156 = por %p154, %p155
      %p158 = scmp.ne.s32.totalorder %s143, %s157
      %p159 = scmp.eq.s32.totalorder %s28, 0
      %p160 = por %p158, %p159
      %s162 = sadd.s32 %s161, 1
      %p165 = scmp.eq.s32.totalorder %s22, 1
      %p166 = scmp.ne.s32.totalorder %s161, %s163
      %p167 = scmp.eq.s32.totalorder %s22, 0
      %p168 = por %p166, %p167
      %p169 = scmp.ne.s32.totalorder %s161, %s163
      %p170 = scmp.eq.s32.totalorder %s27, 1
      %p171 = por %p169, %p170
      %p172 = scmp.ne.s32.totalorder %s163, %s164
      %p173 = scmp.eq.s32.totalorder %s27, 0
      %p174 = por %p172, %p173
      %p175 = scmp.ne.s32.totalorder %s163, %s164
      %p176 = scmp.eq.s32.totalorder %s28, 1
      %p177 = por %p175, %p176
      %p179 = scmp.ne.s32.totalorder %s164, %s178
      %p180 = scmp.eq.s32.totalorder %s28, 0
      %p181 = por %p179, %p180
      %s183 = sadd.s32 %s182, 1
      %p186 = scmp.eq.s32.totalorder %s22, 1
      %p187 = scmp.ne.s32.totalorder %s182, %s184
      %p188 = scmp.eq.s32.totalorder %s22, 0
      %p189 = por %p187, %p188
      %p190 = scmp.ne.s32.totalorder %s182, %s184
      %p191 = scmp.eq.s32.totalorder %s27, 1
      %p192 = por %p190, %p191
      %p193 = scmp.ne.s32.totalorder %s184, %s185
      %p194 = scmp.eq.s32.totalorder %s27, 0
      %p195 = por %p193, %p194
      %p196 = scmp.ne.s32.totalorder %s184, %s185
      %p197 = scmp.eq.s32.totalorder %s28, 1
      %p198 = por %p196, %p197
      %p200 = scmp.ne.s32.totalorder %s185, %s199
      %p201 = scmp.eq.s32.totalorder %s28, 0
      %p202 = por %p200, %p201
      %s203 = ssub.s32 %s22, %s29
      %p204 = scmp.eq.s32.totalorder %s203, 0
      %s206 = sadd.s32 %s205, 1
      %s207 = scalar_select %p204, %s205, %s206
      %p210 = pneg %p204
      %p211 = scmp.eq.s32.totalorder %s22, 1
      %p212 = por %p210, %p211
      %p213 = scmp.ne.s32.totalorder %s205, %s208
      %p214 = scmp.eq.s32.totalorder %s22, 0
      %p215 = por %p213, %p214
      %p216 = scmp.ne.s32.totalorder %s205, %s208
      %p217 = scmp.eq.s32.totalorder %s27, 1
      %p218 = por %p216, %p217
      %p219 = scmp.ne.s32.totalorder %s208, %s209
      %p220 = scmp.eq.s32.totalorder %s27, 0
      %p221 = por %p219, %p220
      %p222 = scmp.ne.s32.totalorder %s208, %s209
      %p223 = scmp.eq.s32.totalorder %s28, 1
      %p224 = por %p222, %p223
      %p226 = scmp.ne.s32.totalorder %s209, %s225
      %p227 = scmp.eq.s32.totalorder %s28, 0
      %p228 = por %p226, %p227
      %p229 = scmp.le.s32.totalorder 1, %s22
      %p230 = scmp.lt.s32.totalorder %s22, 3
      %p231 = pnand %p229, %p230
      %p232 = pneg %p231
      // Predicated region
      $region9: #{tpu_custom_call.1} parent=5 // pred_check
        _
      $region10: #{tpu_custom_call.1} parent=5 // pred_check_branch
        %234 = sbr.rel (%p231) target = $region12
      $region11: #{tpu_custom_call.1} parent=5 // pred_region
        %s235 = ssub.s32 %s22, 1
        // Predicated region
        $region13: #{tpu_custom_call.1} parent=11 // pred_check
          %p236 = pneg %p69
        $region14: #{tpu_custom_call.1} parent=11 // pred_check_branch
          %238 = sbr.rel (%p236) target = $region16
        $region15: #{tpu_custom_call.1} parent=11 // pred_region
          %240 = vsyncadd [#allocation6], 0
          %s241 = sshll.u32 %s1, 4
          %s242 = int_to_ptr.hbm [resolvable:$true] %s241
          %s243 = sshll.u32 [#allocation5], 4
          %s244 = int_to_ptr.vmem [resolvable:$true] %s243
          %249 = dma.hbm_to_vmem [thread:$0]  %s242, 7168, %s244, [#allocation6], 128, 128, 8
        $region16: #{tpu_custom_call.1} parent=11 // pred_fallthru
          _
        // Predicated region
        $region17: #{tpu_custom_call.1} parent=11 // pred_check
          %p250 = pneg %p90
        $region18: #{tpu_custom_call.1} parent=11 // pred_check_branch
          %252 = sbr.rel (%p250) target = $region20
        $region19: #{tpu_custom_call.1} parent=11 // pred_region
          _
        $region20: #{tpu_custom_call.1} parent=11 // pred_fallthru
          _
        // Predicated region
        $region21: #{tpu_custom_call.1} parent=11 // pred_check
          %p253 = pneg %p111
        $region22: #{tpu_custom_call.1} parent=11 // pred_check_branch
          %255 = sbr.rel (%p253) target = $region24
        $region23: #{tpu_custom_call.1} parent=11 // pred_region
          %257 = vsyncadd [#allocation6], 0
          %s258 = sshll.u32 %s3, 4
          %s259 = int_to_ptr.hbm [resolvable:$true] %s258
          %s260 = sshll.u32 [#allocation7], 4
          %s261 = int_to_ptr.vmem [resolvable:$true] %s260
          %266 = dma.hbm_to_vmem [thread:$0]  %s259, 256, %s261, [#allocation6], 128, 128, 8
        $region24: #{tpu_custom_call.1} parent=11 // pred_fallthru
          _
        // Predicated region
        $region25: #{tpu_custom_call.1} parent=11 // pred_check
          %p267 = pneg %p132
        $region26: #{tpu_custom_call.1} parent=11 // pred_check_branch
          %269 = sbr.rel (%p267) target = $region28
        $region27: #{tpu_custom_call.1} parent=11 // pred_region
          %271 = vsyncadd [#allocation9], 0
          %s272 = sshll.u32 %s4, 4
          %s273 = int_to_ptr.hbm [resolvable:$true] %s272
          %s274 = sshll.u32 [#allocation8], 4
          %s275 = int_to_ptr.vmem [resolvable:$true] %s274
          %280 = dma.hbm_to_vmem [thread:$0]  %s273, 6144, %s275, [#allocation9], 384, 384, 24
        $region28: #{tpu_custom_call.1} parent=11 // pred_fallthru
          _
        // Predicated region
        $region29: #{tpu_custom_call.1} parent=11 // pred_check
          %p281 = pneg %p153
        $region30: #{tpu_custom_call.1} parent=11 // pred_check_branch
          %283 = sbr.rel (%p281) target = $region32
        $region31: #{tpu_custom_call.1} parent=11 // pred_region
          _
        $region32: #{tpu_custom_call.1} parent=11 // pred_fallthru
          _
        // Predicated region
        $region33: #{tpu_custom_call.1} parent=11 // pred_check
          %p284 = pneg %p174
        $region34: #{tpu_custom_call.1} parent=11 // pred_check_branch
          %286 = sbr.rel (%p284) target = $region36
        $region35: #{tpu_custom_call.1} parent=11 // pred_region
          %288 = vsyncadd [#allocation9], 0
          %s289 = sshll.u32 %s6, 4
          %s290 = int_to_ptr.hbm [resolvable:$true] %s289
          %s291 = sshll.u32 [#allocation10], 4
          %s292 = int_to_ptr.vmem [resolvable:$true] %s291
          %297 = dma.hbm_to_vmem [thread:$0]  %s290, 2048, %s292, [#allocation9], 128, 128, 8
        $region36: #{tpu_custom_call.1} parent=11 // pred_fallthru
          _
        // Predicated region
        $region37: #{tpu_custom_call.1} parent=11 // pred_check
          %p298 = pneg %p195
        $region38: #{tpu_custom_call.1} parent=11 // pred_check_branch
          %300 = sbr.rel (%p298) target = $region40
        $region39: #{tpu_custom_call.1} parent=11 // pred_region
          _
        $region40: #{tpu_custom_call.1} parent=11 // pred_fallthru
          _
      $region12: #{tpu_custom_call.1} parent=5 // pred_fallthru
        _
      %p301 = scmp.lt.s32.totalorder %s22, 2
      // Predicated region
      $region41: #{tpu_custom_call.1} parent=5 // pred_check
        %p302 = pneg %p301
      $region42: #{tpu_custom_call.1} parent=5 // pred_check_branch
        %304 = sbr.rel (%p302) target = $region44
      $region43: #{tpu_custom_call.1} parent=5 // pred_region
        // Predicated region
        $region45: #{tpu_custom_call.1} parent=43 // pred_check
          %p305 = pneg %p42
        $region46: #{tpu_custom_call.1} parent=43 // pred_check_branch
          %307 = sbr.rel (%p305) target = $region48
        $region47: #{tpu_custom_call.1} parent=43 // pred_region
          %s308 = sand.u32 %s32, 1
          %s309 = scalar_lea.sflag [#allocation3], %s308
          %s310 = sand.u32 %s32, 1
          %s311 = smul.addr %s310, 24
          %s312 = scalar_lea.vmem [#allocation2], %s311
          %314 = vsyncadd %s309, 0
          %s315 = smul.addr %s22, 3
          %s316 = smul.addr %s315, 8
          %s317 = scalar_lea.hbm %s0, %s316
          %s318 = sshll.u32 %s317, 4
          %s319 = int_to_ptr.hbm [resolvable:$true] %s318
          %s320 = sshll.u32 %s312, 4
          %s321 = int_to_ptr.vmem [resolvable:$true] %s320
          %326 = dma.hbm_to_vmem [thread:$0]  %s319, 384, %s321, %s309, 128, 128, 8
        $region48: #{tpu_custom_call.1} parent=43 // pred_fallthru
          _
      $region44: #{tpu_custom_call.1} parent=5 // pred_fallthru
        _
      %p327 = scmp.le.s32.totalorder 1, %s22
      %p328 = scmp.lt.s32.totalorder %s22, 3
      %p329 = pnand %p327, %p328
      %p330 = pneg %p329
      // Predicated region
      $region49: #{tpu_custom_call.1} parent=5 // pred_check
        _
      $region50: #{tpu_custom_call.1} parent=5 // pred_check_branch
        %332 = sbr.rel (%p329) target = $region52
      $region51: #{tpu_custom_call.1} parent=5 // pred_region
        %s333 = ssub.s32 %s22, 1
        %s334 = sand.u32 %s35, 1
        %s335 = scalar_lea.sflag [#allocation3], %s334
        %s336 = sand.u32 %s35, 1
        %s337 = smul.addr %s336, 24
        %s338 = scalar_lea.vmem [#allocation2], %s337
        // Predicated region
        $region53: #{tpu_custom_call.1} parent=51 // pred_check
          %p339 = pneg %p48
        $region54: #{tpu_custom_call.1} parent=51 // pred_check_branch
          %341 = sbr.rel (%p339) target = $region56
        $region55: #{tpu_custom_call.1} parent=51 // pred_region
          %343 = dma.done %s335, 384
        $region56: #{tpu_custom_call.1} parent=51 // pred_fallthru
          _
        // Predicated region
        $region57: #{tpu_custom_call.1} parent=51 // pred_check
          %p344 = pneg %p69
        $region58: #{tpu_custom_call.1} parent=51 // pred_check_branch
          %346 = sbr.rel (%p344) target = $region60
        $region59: #{tpu_custom_call.1} parent=51 // pred_region
          %348 = dma.done [#allocation6], 7168
        $region60: #{tpu_custom_call.1} parent=51 // pred_fallthru
          _
        // Predicated region
        $region61: #{tpu_custom_call.1} parent=51 // pred_check
          %p349 = pneg %p111
        $region62: #{tpu_custom_call.1} parent=51 // pred_check_branch
          %351 = sbr.rel (%p349) target = $region64
        $region63: #{tpu_custom_call.1} parent=51 // pred_region
          %353 = dma.done [#allocation6], 256
        $region64: #{tpu_custom_call.1} parent=51 // pred_fallthru
          _
        // Predicated region
        $region65: #{tpu_custom_call.1} parent=51 // pred_check
          %p354 = pneg %p132
        $region66: #{tpu_custom_call.1} parent=51 // pred_check_branch
          %356 = sbr.rel (%p354) target = $region68
        $region67: #{tpu_custom_call.1} parent=51 // pred_region
          %358 = dma.done [#allocation9], 6144
        $region68: #{tpu_custom_call.1} parent=51 // pred_fallthru
          _
        // Predicated region
        $region69: #{tpu_custom_call.1} parent=51 // pred_check
          %p359 = pneg %p174
        $region70: #{tpu_custom_call.1} parent=51 // pred_check_branch
          %361 = sbr.rel (%p359) target = $region72
        $region71: #{tpu_custom_call.1} parent=51 // pred_region
          %363 = dma.done [#allocation9], 2048
        $region72: #{tpu_custom_call.1} parent=51 // pred_fallthru
          _
        %s364 = sand.u32 %s35, 1
        %s365 = scalar_lea.sflag [#allocation3], %s364
        %s366 = sand.u32 %s35, 1
        %s367 = smul.addr %s366, 24
        %s368 = scalar_lea.vmem [#allocation2], %s367
        %p369 = pneg %p48
        %p370 = pneg %p45
        %p371 = pneg %p69
        %p372 = pneg %p66
        %p373 = pneg %p90
        %p374 = pneg %p87
        %p375 = pneg %p111
        %p376 = pneg %p108
        %p377 = pneg %p132
        %p378 = pneg %p129
        %p379 = pneg %p153
        %p380 = pneg %p150
        %p381 = pneg %p174
        %p382 = pneg %p171
        %p383 = pneg %p195
        %p384 = pneg %p192
        %p385 = pneg %p221
        %p386 = pneg %p218
        %s387 = sand.u32 %s208, 1
        %s388 = scalar_lea.sflag [#allocation4], %s387
        %s389 = sand.u32 %s208, 1
        %s390 = smul.addr %s389, 16
        %s391 = scalar_lea.vmem [#allocation11], %s390
        %v392 = vld [vmem:[%s338] sm:$0xff]
        %v393 = vld [vmem:[%s338 + $0x8] sm:$0xff]
        %v394 = vld [vmem:[%s338 + $0x10] sm:$0xff]
        %v395 = vld [vmem:[#allocation5] sm:$0xff]
        %v396 = vld [vmem:[#allocation5 + $0x8] sm:$0xff]
        %v397 = vld [vmem:[#allocation5 + $0x10] sm:$0xff]
        %v398 = vld [vmem:[#allocation5 + $0x18] sm:$0xff]
        %v399 = vld [vmem:[#allocation5 + $0x20] sm:$0xff]
        %v400 = vld [vmem:[#allocation5 + $0x28] sm:$0xff]
        %v401 = vld [vmem:[#allocation5 + $0x30] sm:$0xff]
        %v402 = vld [vmem:[#allocation5 + $0x38] sm:$0xff]
        %s403 = scalar_lea.vmem [#allocation5], 64
        %v404 = vld [vmem:[%s403] sm:$0xff]
        %v405 = vld [vmem:[%s403 + $0x8] sm:$0xff]
        %v406 = vld [vmem:[%s403 + $0x10] sm:$0xff]
        %v407 = vld [vmem:[%s403 + $0x18] sm:$0xff]
        %v408 = vld [vmem:[%s403 + $0x20] sm:$0xff]
        %v409 = vld [vmem:[%s403 + $0x28] sm:$0xff]
        %v410 = vld [vmem:[%s403 + $0x30] sm:$0xff]
        %v411 = vld [vmem:[%s403 + $0x38] sm:$0xff]
        %vm415 = vcmask 1046528
        %v416 = vrot.slane %v392, 1
        %v417 = vrot.slane %v393, 1
        %v418 = vsel %vm415, %v416, %v417
        %v419 = vrot.slane %v394, 1
        %v420 = vsel %vm415, %v417, %v419
        %vm421 = vcmask 523264
        %v422 = vsel %vm421, %v418, 0
        %v424 = vsel %vm421, %v420, 0
        %426 = vmatpush.msra.mxu0 0.0
        %427 = vmatpush.msra.mxu0 0.0
        %428 = vmatpush.msra.mxu0 0.0
        %429 = vmatpush.msra.mxu0 0.0
        %430 = vmatpush.msra.mxu0 0.0
        %431 = vmatpush.msra.mxu0 0.0
        %432 = vmatpush.msra.mxu0 0.0
        %433 = vmatpush.msra.mxu0 0.0
        %434 = vmatpush.msra.mxu0 %v411
        %435 = vmatpush.msra.mxu0 %v410
        %436 = vmatpush.msra.mxu0 %v409
        %437 = vmatpush.msra.mxu0 %v408
        %438 = vmatpush.msra.mxu0 %v407
        %439 = vmatpush.msra.mxu0 %v406
        %440 = vmatpush.msra.mxu0 %v405
        %441 = vmatpush.msra.mxu0 %v404
        %442 = vmatmul.f32.gmra.mxu0 %v422
        %v443 = vpop.f32.mrf.mxu0
        %v444 = vadd.f32 0.0, %v443
        %445 = vmatmul.f32.gmra.mxu0 %v424
        %v446 = vpop.f32.mrf.mxu0
        %v447 = vadd.f32 0.0, %v446
        %448 = vdwg.mxu0
        %v449 = vsel %vm421, %v392, 0
        %v451 = vsel %vm421, %v393, 0
        %453 = vmatpush.msra.mxu0 0.0
        %454 = vmatpush.msra.mxu0 0.0
        %455 = vmatpush.msra.mxu0 0.0
        %456 = vmatpush.msra.mxu0 0.0
        %457 = vmatpush.msra.mxu0 0.0
        %458 = vmatpush.msra.mxu0 0.0
        %459 = vmatpush.msra.mxu0 0.0
        %460 = vmatpush.msra.mxu0 0.0
        %461 = vmatpush.msra.mxu0 %v402
        %462 = vmatpush.msra.mxu0 %v401
        %463 = vmatpush.msra.mxu0 %v400
        %464 = vmatpush.msra.mxu0 %v399
        %465 = vmatpush.msra.mxu0 %v398
        %466 = vmatpush.msra.mxu0 %v397
        %467 = vmatpush.msra.mxu0 %v396
        %468 = vmatpush.msra.mxu0 %v395
        %469 = vmatmul.f32.gmra.mxu0 %v449
        %v470 = vpop.f32.mrf.mxu0
        %v471 = vadd.f32 %v444, %v470
        %472 = vmatmul.f32.gmra.mxu0 %v451
        %v473 = vpop.f32.mrf.mxu0
        %v474 = vadd.f32 %v447, %v473
        %475 = vdwg.mxu0
        %s476 = scalar_lea.vmem [#allocation5], 128
        %v477 = vld [vmem:[%s476] sm:$0xff]
        %v478 = vld [vmem:[%s476 + $0x8] sm:$0xff]
        %v479 = vld [vmem:[%s476 + $0x10] sm:$0xff]
        %v480 = vld [vmem:[%s476 + $0x18] sm:$0xff]
        %v481 = vld [vmem:[%s476 + $0x20] sm:$0xff]
        %v482 = vld [vmem:[%s476 + $0x28] sm:$0xff]
        %v483 = vld [vmem:[%s476 + $0x30] sm:$0xff]
        %v484 = vld [vmem:[%s476 + $0x38] sm:$0xff]
        %vm485 = vcmask 1045504
        %v486 = vrot.slane %v392, 2
        %v487 = vrot.slane %v393, 2
        %v488 = vsel %vm485, %v486, %v487
        %v489 = vrot.slane %v394, 2
        %v490 = vsel %vm485, %v487, %v489
        %v491 = vsel %vm421, %v488, 0
        %v493 = vsel %vm421, %v490, 0
        %495 = vmatpush.msra.mxu0 0.0
        %496 = vmatpush.msra.mxu0 0.0
        %497 = vmatpush.msra.mxu0 0.0
        %498 = vmatpush.msra.mxu0 0.0
        %499 = vmatpush.msra.mxu0 0.0
        %500 = vmatpush.msra.mxu0 0.0
        %501 = vmatpush.msra.mxu0 0.0
        %502 = vmatpush.msra.mxu0 0.0
        %503 = vmatpush.msra.mxu0 %v484
        %504 = vmatpush.msra.mxu0 %v483
        %505 = vmatpush.msra.mxu0 %v482
        %506 = vmatpush.msra.mxu0 %v481
        %507 = vmatpush.msra.mxu0 %v480
        %508 = vmatpush.msra.mxu0 %v479
        %509 = vmatpush.msra.mxu0 %v478
        %510 = vmatpush.msra.mxu0 %v477
        %511 = vmatmul.f32.gmra.mxu0 %v491
        %v512 = vpop.f32.mrf.mxu0
        %v513 = vadd.f32 0.0, %v512
        %514 = vmatmul.f32.gmra.mxu0 %v493
        %v515 = vpop.f32.mrf.mxu0
        %v516 = vadd.f32 0.0, %v515
        %517 = vdwg.mxu0
        %v518 = vadd.f32 %v471, %v513
        %v519 = vadd.f32 %v474, %v516
        %s520 = scalar_lea.vmem [#allocation5], 192
        %v521 = vld [vmem:[%s520] sm:$0xff]
        %v522 = vld [vmem:[%s520 + $0x8] sm:$0xff]
        %v523 = vld [vmem:[%s520 + $0x10] sm:$0xff]
        %v524 = vld [vmem:[%s520 + $0x18] sm:$0xff]
        %v525 = vld [vmem:[%s520 + $0x20] sm:$0xff]
        %v526 = vld [vmem:[%s520 + $0x28] sm:$0xff]
        %v527 = vld [vmem:[%s520 + $0x30] sm:$0xff]
        %v528 = vld [vmem:[%s520 + $0x38] sm:$0xff]
        %vm529 = vcmask 1044480
        %v530 = vrot.slane %v392, 3
        %v531 = vrot.slane %v393, 3
        %v532 = vsel %vm529, %v530, %v531
        %v533 = vrot.slane %v394, 3
        %v534 = vsel %vm529, %v531, %v533
        %v535 = vsel %vm421, %v532, 0
        %v537 = vsel %vm421, %v534, 0
        %539 = vmatpush.msra.mxu0 0.0
        %540 = vmatpush.msra.mxu0 0.0
        %541 = vmatpush.msra.mxu0 0.0
        %542 = vmatpush.msra.mxu0 0.0
        %543 = vmatpush.msra.mxu0 0.0
        %544 = vmatpush.msra.mxu0 0.0
        %545 = vmatpush.msra.mxu0 0.0
        %546 = vmatpush.msra.mxu0 0.0
        %547 = vmatpush.msra.mxu0 %v528
        %548 = vmatpush.msra.mxu0 %v527
        %549 = vmatpush.msra.mxu0 %v526
        %550 = vmatpush.msra.mxu0 %v525
        %551 = vmatpush.msra.mxu0 %v524
        %552 = vmatpush.msra.mxu0 %v523
        %553 = vmatpush.msra.mxu0 %v522
        %554 = vmatpush.msra.mxu0 %v521
        %555 = vmatmul.f32.gmra.mxu0 %v535
        %v556 = vpop.f32.mrf.mxu0
        %v557 = vadd.f32 0.0, %v556
        %558 = vmatmul.f32.gmra.mxu0 %v537
        %v559 = vpop.f32.mrf.mxu0
        %v560 = vadd.f32 0.0, %v559
        %561 = vdwg.mxu0
        %v562 = vadd.f32 %v518, %v557
        %v563 = vadd.f32 %v519, %v560
        %s564 = scalar_lea.vmem [#allocation5], 256
        %v565 = vld [vmem:[%s564] sm:$0xff]
        %v566 = vld [vmem:[%s564 + $0x8] sm:$0xff]
        %v567 = vld [vmem:[%s564 + $0x10] sm:$0xff]
        %v568 = vld [vmem:[%s564 + $0x18] sm:$0xff]
        %v569 = vld [vmem:[%s564 + $0x20] sm:$0xff]
        %v570 = vld [vmem:[%s564 + $0x28] sm:$0xff]
        %v571 = vld [vmem:[%s564 + $0x30] sm:$0xff]
        %v572 = vld [vmem:[%s564 + $0x38] sm:$0xff]
        %vm573 = vcmask 1043456
        %v574 = vrot.slane %v392, 4
        %v575 = vrot.slane %v393, 4
        %v576 = vsel %vm573, %v574, %v575
        %v577 = vrot.slane %v394, 4
        %v578 = vsel %vm573, %v575, %v577
        %v579 = vsel %vm421, %v576, 0
        %v581 = vsel %vm421, %v578, 0
        %583 = vmatpush.msra.mxu0 0.0
        %584 = vmatpush.msra.mxu0 0.0
        %585 = vmatpush.msra.mxu0 0.0
        %586 = vmatpush.msra.mxu0 0.0
        %587 = vmatpush.msra.mxu0 0.0
        %588 = vmatpush.msra.mxu0 0.0
        %589 = vmatpush.msra.mxu0 0.0
        %590 = vmatpush.msra.mxu0 0.0
        %591 = vmatpush.msra.mxu0 %v572
        %592 = vmatpush.msra.mxu0 %v571
        %593 = vmatpush.msra.mxu0 %v570
        %594 = vmatpush.msra.mxu0 %v569
        %595 = vmatpush.msra.mxu0 %v568
        %596 = vmatpush.msra.mxu0 %v567
        %597 = vmatpush.msra.mxu0 %v566
        %598 = vmatpush.msra.mxu0 %v565
        %599 = vmatmul.f32.gmra.mxu0 %v579
        %v600 = vpop.f32.mrf.mxu0
        %v601 = vadd.f32 0.0, %v600
        %602 = vmatmul.f32.gmra.mxu0 %v581
        %v603 = vpop.f32.mrf.mxu0
        %v604 = vadd.f32 0.0, %v603
        %605 = vdwg.mxu0
        %v606 = vadd.f32 %v562, %v601
        %v607 = vadd.f32 %v563, %v604
        %s608 = scalar_lea.vmem [#allocation5], 320
        %v609 = vld [vmem:[%s608] sm:$0xff]
        %v610 = vld [vmem:[%s608 + $0x8] sm:$0xff]
        %v611 = vld [vmem:[%s608 + $0x10] sm:$0xff]
        %v612 = vld [vmem:[%s608 + $0x18] sm:$0xff]
        %v613 = vld [vmem:[%s608 + $0x20] sm:$0xff]
        %v614 = vld [vmem:[%s608 + $0x28] sm:$0xff]
        %v615 = vld [vmem:[%s608 + $0x30] sm:$0xff]
        %v616 = vld [vmem:[%s608 + $0x38] sm:$0xff]
        %vm617 = vcmask 1042432
        %v618 = vrot.slane %v392, 5
        %v619 = vrot.slane %v393, 5
        %v620 = vsel %vm617, %v618, %v619
        %v621 = vrot.slane %v394, 5
        %v622 = vsel %vm617, %v619, %v621
        %v623 = vsel %vm421, %v620, 0
        %v625 = vsel %vm421, %v622, 0
        %627 = vmatpush.msra.mxu0 0.0
        %628 = vmatpush.msra.mxu0 0.0
        %629 = vmatpush.msra.mxu0 0.0
        %630 = vmatpush.msra.mxu0 0.0
        %631 = vmatpush.msra.mxu0 0.0
        %632 = vmatpush.msra.mxu0 0.0
        %633 = vmatpush.msra.mxu0 0.0
        %634 = vmatpush.msra.mxu0 0.0
        %635 = vmatpush.msra.mxu0 %v616
        %636 = vmatpush.msra.mxu0 %v615
        %637 = vmatpush.msra.mxu0 %v614
        %638 = vmatpush.msra.mxu0 %v613
        %639 = vmatpush.msra.mxu0 %v612
        %640 = vmatpush.msra.mxu0 %v611
        %641 = vmatpush.msra.mxu0 %v610
        %642 = vmatpush.msra.mxu0 %v609
        %643 = vmatmul.f32.gmra.mxu0 %v623
        %v644 = vpop.f32.mrf.mxu0
        %v645 = vadd.f32 0.0, %v644
        %646 = vmatmul.f32.gmra.mxu0 %v625
        %v647 = vpop.f32.mrf.mxu0
        %v648 = vadd.f32 0.0, %v647
        %649 = vdwg.mxu0
        %v650 = vadd.f32 %v606, %v645
        %v651 = vadd.f32 %v607, %v648
        %s652 = scalar_lea.vmem [#allocation5], 384
        %v653 = vld [vmem:[%s652] sm:$0xff]
        %v654 = vld [vmem:[%s652 + $0x8] sm:$0xff]
        %v655 = vld [vmem:[%s652 + $0x10] sm:$0xff]
        %v656 = vld [vmem:[%s652 + $0x18] sm:$0xff]
        %v657 = vld [vmem:[%s652 + $0x20] sm:$0xff]
        %v658 = vld [vmem:[%s652 + $0x28] sm:$0xff]
        %v659 = vld [vmem:[%s652 + $0x30] sm:$0xff]
        %v660 = vld [vmem:[%s652 + $0x38] sm:$0xff]
        %vm661 = vcmask 1041408
        %v662 = vrot.slane %v392, 6
        %v663 = vrot.slane %v393, 6
        %v664 = vsel %vm661, %v662, %v663
        %v665 = vrot.slane %v394, 6
        %v666 = vsel %vm661, %v663, %v665
        %v667 = vsel %vm421, %v664, 0
        %v669 = vsel %vm421, %v666, 0
        %671 = vmatpush.msra.mxu0 0.0
        %672 = vmatpush.msra.mxu0 0.0
        %673 = vmatpush.msra.mxu0 0.0
        %674 = vmatpush.msra.mxu0 0.0
        %675 = vmatpush.msra.mxu0 0.0
        %676 = vmatpush.msra.mxu0 0.0
        %677 = vmatpush.msra.mxu0 0.0
        %678 = vmatpush.msra.mxu0 0.0
        %679 = vmatpush.msra.mxu0 %v660
        %680 = vmatpush.msra.mxu0 %v659
        %681 = vmatpush.msra.mxu0 %v658
        %682 = vmatpush.msra.mxu0 %v657
        %683 = vmatpush.msra.mxu0 %v656
        %684 = vmatpush.msra.mxu0 %v655
        %685 = vmatpush.msra.mxu0 %v654
        %686 = vmatpush.msra.mxu0 %v653
        %687 = vmatmul.f32.gmra.mxu0 %v667
        %v688 = vpop.f32.mrf.mxu0
        %v689 = vadd.f32 0.0, %v688
        %690 = vmatmul.f32.gmra.mxu0 %v669
        %v691 = vpop.f32.mrf.mxu0
        %v692 = vadd.f32 0.0, %v691
        %693 = vdwg.mxu0
        %v694 = vadd.f32 %v650, %v689
        %v695 = vadd.f32 %v651, %v692
        %v696 = vld [vmem:[%s2] sm:$0x1]
        %v698 = vperm.slane %v696, 0
        %v700 = vadd.f32 %v694, %v698
        %v701 = vadd.f32 %v695, %v698
        %v702 = vmax.f32 %v700, 0.0
        %v703 = vmax.f32 %v701, 0.0
        %v704 = vld [vmem:[#allocation7] sm:$0xff]
        %v705 = vld [vmem:[#allocation7 + $0x8] sm:$0xff]
        %v706 = vadd.f32 %v702, %v704
        %v707 = vadd.f32 %v703, %v705
        %v708 = vld [vmem:[#allocation8] sm:$0xff]
        %v709 = vld [vmem:[#allocation8 + $0x8] sm:$0xff]
        %v710 = vld [vmem:[#allocation8 + $0x10] sm:$0xff]
        %v711 = vld [vmem:[#allocation8 + $0x18] sm:$0xff]
        %v712 = vld [vmem:[#allocation8 + $0x20] sm:$0xff]
        %v713 = vld [vmem:[#allocation8 + $0x28] sm:$0xff]
        %v714 = vld [vmem:[#allocation8 + $0x30] sm:$0xff]
        %v715 = vld [vmem:[#allocation8 + $0x38] sm:$0xff]
        %v716 = vld [vmem:[#allocation8 + $0x40] sm:$0xff]
        %v717 = vld [vmem:[#allocation8 + $0x48] sm:$0xff]
        %v718 = vld [vmem:[#allocation8 + $0x50] sm:$0xff]
        %v719 = vld [vmem:[#allocation8 + $0x58] sm:$0xff]
        %v720 = vld [vmem:[#allocation8 + $0x60] sm:$0xff]
        %v721 = vld [vmem:[#allocation8 + $0x68] sm:$0xff]
        %v722 = vld [vmem:[#allocation8 + $0x70] sm:$0xff]
        %v723 = vld [vmem:[#allocation8 + $0x78] sm:$0xff]
        %v724 = vld [vmem:[#allocation8 + $0x80] sm:$0xff]
        %v725 = vld [vmem:[#allocation8 + $0x88] sm:$0xff]
        %v726 = vld [vmem:[#allocation8 + $0x90] sm:$0xff]
        %v727 = vld [vmem:[#allocation8 + $0x98] sm:$0xff]
        %v728 = vld [vmem:[#allocation8 + $0xa0] sm:$0xff]
        %v729 = vld [vmem:[#allocation8 + $0xa8] sm:$0xff]
        %v730 = vld [vmem:[#allocation8 + $0xb0] sm:$0xff]
        %v731 = vld [vmem:[#allocation8 + $0xb8] sm:$0xff]
        %v732 = vld [vmem:[#allocation8 + $0xc0] sm:$0xff]
        %v733 = vld [vmem:[#allocation8 + $0xc8] sm:$0xff]
        %v734 = vld [vmem:[#allocation8 + $0xd0] sm:$0xff]
        %v735 = vld [vmem:[#allocation8 + $0xd8] sm:$0xff]
        %v736 = vld [vmem:[#allocation8 + $0xe0] sm:$0xff]
        %v737 = vld [vmem:[#allocation8 + $0xe8] sm:$0xff]
        %v738 = vld [vmem:[#allocation8 + $0xf0] sm:$0xff]
        %v739 = vld [vmem:[#allocation8 + $0xf8] sm:$0xff]
        %v740 = vld [vmem:[#allocation8 + $0x100] sm:$0xff]
        %v741 = vld [vmem:[#allocation8 + $0x108] sm:$0xff]
        %v742 = vld [vmem:[#allocation8 + $0x110] sm:$0xff]
        %v743 = vld [vmem:[#allocation8 + $0x118] sm:$0xff]
        %v744 = vld [vmem:[#allocation8 + $0x120] sm:$0xff]
        %v745 = vld [vmem:[#allocation8 + $0x128] sm:$0xff]
        %v746 = vld [vmem:[#allocation8 + $0x130] sm:$0xff]
        %v747 = vld [vmem:[#allocation8 + $0x138] sm:$0xff]
        %v748 = vld [vmem:[#allocation8 + $0x140] sm:$0xff]
        %v749 = vld [vmem:[#allocation8 + $0x148] sm:$0xff]
        %v750 = vld [vmem:[#allocation8 + $0x150] sm:$0xff]
        %v751 = vld [vmem:[#allocation8 + $0x158] sm:$0xff]
        %v752 = vld [vmem:[#allocation8 + $0x160] sm:$0xff]
        %v753 = vld [vmem:[#allocation8 + $0x168] sm:$0xff]
        %v754 = vld [vmem:[#allocation8 + $0x170] sm:$0xff]
        %v755 = vld [vmem:[#allocation8 + $0x178] sm:$0xff]
        %v756 = vld [vmem:[%s5] sm:$0x7]
        %v758 = vperm.slane %v756, 0
        %v759 = vperm.slane %v756, 1
        %v760 = vperm.slane %v756, 2
        %764 = vmatpush.msra.mxu0 %v753
        %765 = vmatpush.msra.mxu0 %v750
        %766 = vmatpush.msra.mxu0 %v747
        %767 = vmatpush.msra.mxu0 %v744
        %768 = vmatpush.msra.mxu0 %v741
        %769 = vmatpush.msra.mxu0 %v738
        %770 = vmatpush.msra.mxu0 %v735
        %771 = vmatpush.msra.mxu0 %v732
        %772 = vmatpush.msra.mxu0 %v729
        %773 = vmatpush.msra.mxu0 %v726
        %774 = vmatpush.msra.mxu0 %v723
        %775 = vmatpush.msra.mxu0 %v720
        %776 = vmatpush.msra.mxu0 %v717
        %777 = vmatpush.msra.mxu0 %v714
        %778 = vmatpush.msra.mxu0 %v711
        %779 = vmatpush.msra.mxu0 %v708
        %780 = vmatmul.f32.gmra.mxu0 %v706
        %v781 = vpop.f32.mrf.mxu0
        %v782 = vadd.f32 %v758, %v781
        %783 = vmatmul.f32.gmra.mxu0 %v707
        %v784 = vpop.f32.mrf.mxu0
        %v785 = vadd.f32 %v758, %v784
        %786 = vdwg.mxu0
        %787 = vmatpush.msra.mxu0 %v754
        %788 = vmatpush.msra.mxu0 %v751
        %789 = vmatpush.msra.mxu0 %v748
        %790 = vmatpush.msra.mxu0 %v745
        %791 = vmatpush.msra.mxu0 %v742
        %792 = vmatpush.msra.mxu0 %v739
        %793 = vmatpush.msra.mxu0 %v736
        %794 = vmatpush.msra.mxu0 %v733
        %795 = vmatpush.msra.mxu0 %v730
        %796 = vmatpush.msra.mxu0 %v727
        %797 = vmatpush.msra.mxu0 %v724
        %798 = vmatpush.msra.mxu0 %v721
        %799 = vmatpush.msra.mxu0 %v718
        %800 = vmatpush.msra.mxu0 %v715
        %801 = vmatpush.msra.mxu0 %v712
        %802 = vmatpush.msra.mxu0 %v709
        %803 = vmatmul.f32.gmra.mxu0 %v706
        %v804 = vpop.f32.mrf.mxu0
        %v805 = vadd.f32 %v759, %v804
        %806 = vmatmul.f32.gmra.mxu0 %v707
        %v807 = vpop.f32.mrf.mxu0
        %v808 = vadd.f32 %v759, %v807
        %809 = vdwg.mxu0
        %810 = vmatpush.msra.mxu0 %v755
        %811 = vmatpush.msra.mxu0 %v752
        %812 = vmatpush.msra.mxu0 %v749
        %813 = vmatpush.msra.mxu0 %v746
        %814 = vmatpush.msra.mxu0 %v743
        %815 = vmatpush.msra.mxu0 %v740
        %816 = vmatpush.msra.mxu0 %v737
        %817 = vmatpush.msra.mxu0 %v734
        %818 = vmatpush.msra.mxu0 %v731
        %819 = vmatpush.msra.mxu0 %v728
        %820 = vmatpush.msra.mxu0 %v725
        %821 = vmatpush.msra.mxu0 %v722
        %822 = vmatpush.msra.mxu0 %v719
        %823 = vmatpush.msra.mxu0 %v716
        %824 = vmatpush.msra.mxu0 %v713
        %825 = vmatpush.msra.mxu0 %v710
        %826 = vmatmul.f32.gmra.mxu0 %v706
        %v827 = vpop.f32.mrf.mxu0
        %v828 = vadd.f32 %v760, %v827
        %829 = vmatmul.f32.gmra.mxu0 %v707
        %v830 = vpop.f32.mrf.mxu0
        %v831 = vadd.f32 %v760, %v830
        %832 = vdwg.mxu0
        %vm833 = vcmask 261120
        %v835 = vsel %vm833, %v782, 0
        %v838 = vsel %vm833, %v785, 0
        %v841 = vsel %vm833, %v805, 0
        %v844 = vsel %vm833, %v808, 0
        %846 = vmatpush.xpose.msra.mxu0 0.0
        %847 = vmatpush.xpose.msra.mxu0 0.0
        %848 = vmatpush.xpose.msra.mxu0 0.0
        %849 = vmatpush.xpose.msra.mxu0 0.0
        %850 = vmatpush.xpose.msra.mxu0 0.0
        %851 = vmatpush.xpose.msra.mxu0 0.0
        %852 = vmatpush.xpose.msra.mxu0 0.0
        %853 = vmatpush.xpose.msra.mxu0 0.0
        %854 = vmatpush.xpose.msra.mxu0 0.0
        %855 = vmatpush.xpose.msra.mxu0 0.0
        %856 = vmatpush.xpose.msra.mxu0 0.0
        %857 = vmatpush.xpose.msra.mxu0 0.0
        %858 = vmatpush.xpose.msra.mxu0 0.0
        %859 = vmatpush.xpose.msra.mxu0 0.0
        %860 = vmatpush.xpose.msra.mxu0 %v844
        %861 = vmatpush.xpose.msra.mxu0 %v841
        %862 = vmatmul.f32.gmra.mxu0 %v835
        %v863 = vpop.f32.mrf.mxu0
        %v864 = vadd.f32 0.0, %v863
        %865 = vmatmul.f32.gmra.mxu0 %v838
        %v866 = vpop.f32.mrf.mxu0
        %v867 = vadd.f32 0.0, %v866
        %868 = vdwg.mxu0
        %v869 = vmul.f32 %v864, 0.20412415
        %v870 = vmul.f32 %v867, 0.20412415
        %vm871 = vcmask 130048
        %v872 = vsel %vm871, %v869, -inf
        %873 = vmax.xlane.f32.xlu0 %v872
        %v874 = vpop.xlane.xlu0 %873
        %v875 = vsel %vm871, %v870, -inf
        %876 = vmax.xlane.f32.xlu0 %v875
        %v877 = vpop.xlane.xlu0 %876
        %v878 = vsub.f32 %v869, %v874
        %v879 = vsub.f32 %v870, %v877
        %v880 = vmul.f32 %v878, 1.442695
        %v881 = vpow.pop %v880
        %v882 = vmul.f32 %v879, 1.442695
        %v883 = vpow.pop %v882
        %v884 = vsel %vm871, %v881, 0.0
        %885 = vadd.xlane.f32.xlu0 %v884
        %v886 = vpop.xlane.xlu0 %885
        %v887 = vsel %vm871, %v883, 0.0
        %888 = vadd.xlane.f32.xlu0 %v887
        %v889 = vpop.xlane.xlu0 %888
        %v890 = vrcp.pop %v886
        %v891 = vrcp.pop %v889
        %v892 = vmul.f32 %v881, %v890
        %v893 = vmul.f32 %v883, %v891
        %v895 = vsel %vm871, %v892, 0
        %v898 = vsel %vm871, %v893, 0
        %900 = vmatpush.msra.mxu0 0.0
        %901 = vmatpush.msra.mxu0 0.0
        %902 = vmatpush.msra.mxu0 0.0
        %903 = vmatpush.msra.mxu0 0.0
        %904 = vmatpush.msra.mxu0 0.0
        %905 = vmatpush.msra.mxu0 0.0
        %906 = vmatpush.msra.mxu0 0.0
        %907 = vmatpush.msra.mxu0 0.0
        %908 = vmatpush.msra.mxu0 0.0
        %909 = vmatpush.msra.mxu0 0.0
        %910 = vmatpush.msra.mxu0 0.0
        %911 = vmatpush.msra.mxu0 0.0
        %912 = vmatpush.msra.mxu0 0.0
        %913 = vmatpush.msra.mxu0 0.0
        %914 = vmatpush.msra.mxu0 %v831
        %915 = vmatpush.msra.mxu0 %v828
        %916 = vmatmul.f32.gmra.mxu0 %v895
        %v917 = vpop.f32.mrf.mxu0
        %v918 = vadd.f32 0.0, %v917
        %919 = vmatmul.f32.gmra.mxu0 %v898
        %v920 = vpop.f32.mrf.mxu0
        %v921 = vadd.f32 0.0, %v920
        %922 = vdwg.mxu0
        %923 = vrot.lane.b32.xlu0 %v782, 96
        %v924 = vpop.permute.xlu0 %923
        %925 = vrot.lane.b32.xlu0 %v785, 96
        %v926 = vpop.permute.xlu0 %925
        %927 = vrot.lane.b32.xlu0 %v805, 96
        %v928 = vpop.permute.xlu0 %927
        %929 = vrot.lane.b32.xlu0 %v808, 96
        %v930 = vpop.permute.xlu0 %929
        %v931 = vsel %vm833, %v924, 0
        %v933 = vsel %vm833, %v926, 0
        %v935 = vsel %vm833, %v928, 0
        %v937 = vsel %vm833, %v930, 0
        %939 = vmatpush.xpose.msra.mxu0 0.0
        %940 = vmatpush.xpose.msra.mxu0 0.0
        %941 = vmatpush.xpose.msra.mxu0 0.0
        %942 = vmatpush.xpose.msra.mxu0 0.0
        %943 = vmatpush.xpose.msra.mxu0 0.0
        %944 = vmatpush.xpose.msra.mxu0 0.0
        %945 = vmatpush.xpose.msra.mxu0 0.0
        %946 = vmatpush.xpose.msra.mxu0 0.0
        %947 = vmatpush.xpose.msra.mxu0 0.0
        %948 = vmatpush.xpose.msra.mxu0 0.0
        %949 = vmatpush.xpose.msra.mxu0 0.0
        %950 = vmatpush.xpose.msra.mxu0 0.0
        %951 = vmatpush.xpose.msra.mxu0 0.0
        %952 = vmatpush.xpose.msra.mxu0 0.0
        %953 = vmatpush.xpose.msra.mxu0 %v937
        %954 = vmatpush.xpose.msra.mxu0 %v935
        %955 = vmatmul.f32.gmra.mxu0 %v931
        %v956 = vpop.f32.mrf.mxu0
        %v957 = vadd.f32 0.0, %v956
        %958 = vmatmul.f32.gmra.mxu0 %v933
        %v959 = vpop.f32.mrf.mxu0
        %v960 = vadd.f32 0.0, %v959
        %961 = vdwg.mxu0
        %v962 = vmul.f32 %v957, 0.20412415
        %v963 = vmul.f32 %v960, 0.20412415
        %v964 = vsel %vm871, %v962, -inf
        %965 = vmax.xlane.f32.xlu0 %v964
        %v966 = vpop.xlane.xlu0 %965
        %v967 = vsel %vm871, %v963, -inf
        %968 = vmax.xlane.f32.xlu0 %v967
        %v969 = vpop.xlane.xlu0 %968
        %v970 = vsub.f32 %v962, %v966
        %v971 = vsub.f32 %v963, %v969
        %v972 = vmul.f32 %v970, 1.442695
        %v973 = vpow.pop %v972
        %v974 = vmul.f32 %v971, 1.442695
        %v975 = vpow.pop %v974
        %v976 = vsel %vm871, %v973, 0.0
        %977 = vadd.xlane.f32.xlu0 %v976
        %v978 = vpop.xlane.xlu0 %977
        %v979 = vsel %vm871, %v975, 0.0
        %980 = vadd.xlane.f32.xlu0 %v979
        %v981 = vpop.xlane.xlu0 %980
        %v982 = vrcp.pop %v978
        %v983 = vrcp.pop %v981
        %v984 = vmul.f32 %v973, %v982
        %v985 = vmul.f32 %v975, %v983
        %988 = vrot.lane.b32.xlu0 %v828, 96
        %v989 = vpop.permute.xlu0 %988
        %990 = vrot.lane.b32.xlu0 %v831, 96
        %v991 = vpop.permute.xlu0 %990
        %v995 = vsel %vm871, %v984, 0
        %v998 = vsel %vm871, %v985, 0
        %1000 = vmatpush.msra.mxu0 0.0
        %1001 = vmatpush.msra.mxu0 0.0
        %1002 = vmatpush.msra.mxu0 0.0
        %1003 = vmatpush.msra.mxu0 0.0
        %1004 = vmatpush.msra.mxu0 0.0
        %1005 = vmatpush.msra.mxu0 0.0
        %1006 = vmatpush.msra.mxu0 0.0
        %1007 = vmatpush.msra.mxu0 0.0
        %1008 = vmatpush.msra.mxu0 0.0
        %1009 = vmatpush.msra.mxu0 0.0
        %1010 = vmatpush.msra.mxu0 0.0
        %1011 = vmatpush.msra.mxu0 0.0
        %1012 = vmatpush.msra.mxu0 0.0
        %1013 = vmatpush.msra.mxu0 0.0
        %1014 = vmatpush.msra.mxu0 %v991
        %1015 = vmatpush.msra.mxu0 %v989
        %1016 = vmatmul.f32.gmra.mxu0 %v995
        %v1017 = vpop.f32.mrf.mxu0
        %v1018 = vadd.f32 0.0, %v1017
        %1019 = vmatmul.f32.gmra.mxu0 %v998
        %v1020 = vpop.f32.mrf.mxu0
        %v1021 = vadd.f32 0.0, %v1020
        %1022 = vdwg.mxu0
        %1023 = vrot.lane.b32.xlu0 %v782, 64
        %v1024 = vpop.permute.xlu0 %1023
        %1025 = vrot.lane.b32.xlu0 %v785, 64
        %v1026 = vpop.permute.xlu0 %1025
        %1027 = vrot.lane.b32.xlu0 %v805, 64
        %v1028 = vpop.permute.xlu0 %1027
        %1029 = vrot.lane.b32.xlu0 %v808, 64
        %v1030 = vpop.permute.xlu0 %1029
        %v1031 = vsel %vm833, %v1024, 0
        %v1033 = vsel %vm833, %v1026, 0
        %v1035 = vsel %vm833, %v1028, 0
        %v1037 = vsel %vm833, %v1030, 0
        %1039 = vmatpush.xpose.msra.mxu0 0.0
        %1040 = vmatpush.xpose.msra.mxu0 0.0
        %1041 = vmatpush.xpose.msra.mxu0 0.0
        %1042 = vmatpush.xpose.msra.mxu0 0.0
        %1043 = vmatpush.xpose.msra.mxu0 0.0
        %1044 = vmatpush.xpose.msra.mxu0 0.0
        %1045 = vmatpush.xpose.msra.mxu0 0.0
        %1046 = vmatpush.xpose.msra.mxu0 0.0
        %1047 = vmatpush.xpose.msra.mxu0 0.0
        %1048 = vmatpush.xpose.msra.mxu0 0.0
        %1049 = vmatpush.xpose.msra.mxu0 0.0
        %1050 = vmatpush.xpose.msra.mxu0 0.0
        %1051 = vmatpush.xpose.msra.mxu0 0.0
        %1052 = vmatpush.xpose.msra.mxu0 0.0
        %1053 = vmatpush.xpose.msra.mxu0 %v1037
        %1054 = vmatpush.xpose.msra.mxu0 %v1035
        %1055 = vmatmul.f32.gmra.mxu0 %v1031
        %v1056 = vpop.f32.mrf.mxu0
        %v1057 = vadd.f32 0.0, %v1056
        %1058 = vmatmul.f32.gmra.mxu0 %v1033
        %v1059 = vpop.f32.mrf.mxu0
        %v1060 = vadd.f32 0.0, %v1059
        %1061 = vdwg.mxu0
        %v1062 = vmul.f32 %v1057, 0.20412415
        %v1063 = vmul.f32 %v1060, 0.20412415
        %v1064 = vsel %vm871, %v1062, -inf
        %1065 = vmax.xlane.f32.xlu0 %v1064
        %v1066 = vpop.xlane.xlu0 %1065
        %v1067 = vsel %vm871, %v1063, -inf
        %1068 = vmax.xlane.f32.xlu0 %v1067
        %v1069 = vpop.xlane.xlu0 %1068
        %v1070 = vsub.f32 %v1062, %v1066
        %v1071 = vsub.f32 %v1063, %v1069
        %v1072 = vmul.f32 %v1070, 1.442695
        %v1073 = vpow.pop %v1072
        %v1074 = vmul.f32 %v1071, 1.442695
        %v1075 = vpow.pop %v1074
        %v1076 = vsel %vm871, %v1073, 0.0
        %1077 = vadd.xlane.f32.xlu0 %v1076
        %v1078 = vpop.xlane.xlu0 %1077
        %v1079 = vsel %vm871, %v1075, 0.0
        %1080 = vadd.xlane.f32.xlu0 %v1079
        %v1081 = vpop.xlane.xlu0 %1080
        %v1082 = vrcp.pop %v1078
        %v1083 = vrcp.pop %v1081
        %v1084 = vmul.f32 %v1073, %v1082
        %v1085 = vmul.f32 %v1075, %v1083
        %1086 = vrot.lane.b32.xlu0 %v828, 64
        %v1087 = vpop.permute.xlu0 %1086
        %1088 = vrot.lane.b32.xlu0 %v831, 64
        %v1089 = vpop.permute.xlu0 %1088
        %v1093 = vsel %vm871, %v1084, 0
        %v1096 = vsel %vm871, %v1085, 0
        %1098 = vmatpush.msra.mxu0 0.0
        %1099 = vmatpush.msra.mxu0 0.0
        %1100 = vmatpush.msra.mxu0 0.0
        %1101 = vmatpush.msra.mxu0 0.0
        %1102 = vmatpush.msra.mxu0 0.0
        %1103 = vmatpush.msra.mxu0 0.0
        %1104 = vmatpush.msra.mxu0 0.0
        %1105 = vmatpush.msra.mxu0 0.0
        %1106 = vmatpush.msra.mxu0 0.0
        %1107 = vmatpush.msra.mxu0 0.0
        %1108 = vmatpush.msra.mxu0 0.0
        %1109 = vmatpush.msra.mxu0 0.0
        %1110 = vmatpush.msra.mxu0 0.0
        %1111 = vmatpush.msra.mxu0 0.0
        %1112 = vmatpush.msra.mxu0 %v1089
        %1113 = vmatpush.msra.mxu0 %v1087
        %1114 = vmatmul.f32.gmra.mxu0 %v1093
        %v1115 = vpop.f32.mrf.mxu0
        %v1116 = vadd.f32 0.0, %v1115
        %1117 = vmatmul.f32.gmra.mxu0 %v1096
        %v1118 = vpop.f32.mrf.mxu0
        %v1119 = vadd.f32 0.0, %v1118
        %1120 = vdwg.mxu0
        %1121 = vrot.lane.b32.xlu0 %v782, 32
        %v1122 = vpop.permute.xlu0 %1121
        %1123 = vrot.lane.b32.xlu0 %v785, 32
        %v1124 = vpop.permute.xlu0 %1123
        %1125 = vrot.lane.b32.xlu0 %v805, 32
        %v1126 = vpop.permute.xlu0 %1125
        %1127 = vrot.lane.b32.xlu0 %v808, 32
        %v1128 = vpop.permute.xlu0 %1127
        %v1129 = vsel %vm833, %v1122, 0
        %v1131 = vsel %vm833, %v1124, 0
        %v1133 = vsel %vm833, %v1126, 0
        %v1135 = vsel %vm833, %v1128, 0
        %1137 = vmatpush.xpose.msra.mxu0 0.0
        %1138 = vmatpush.xpose.msra.mxu0 0.0
        %1139 = vmatpush.xpose.msra.mxu0 0.0
        %1140 = vmatpush.xpose.msra.mxu0 0.0
        %1141 = vmatpush.xpose.msra.mxu0 0.0
        %1142 = vmatpush.xpose.msra.mxu0 0.0
        %1143 = vmatpush.xpose.msra.mxu0 0.0
        %1144 = vmatpush.xpose.msra.mxu0 0.0
        %1145 = vmatpush.xpose.msra.mxu0 0.0
        %1146 = vmatpush.xpose.msra.mxu0 0.0
        %1147 = vmatpush.xpose.msra.mxu0 0.0
        %1148 = vmatpush.xpose.msra.mxu0 0.0
        %1149 = vmatpush.xpose.msra.mxu0 0.0
        %1150 = vmatpush.xpose.msra.mxu0 0.0
        %1151 = vmatpush.xpose.msra.mxu0 %v1135
        %1152 = vmatpush.xpose.msra.mxu0 %v1133
        %1153 = vmatmul.f32.gmra.mxu0 %v1129
        %v1154 = vpop.f32.mrf.mxu0
        %v1155 = vadd.f32 0.0, %v1154
        %1156 = vmatmul.f32.gmra.mxu0 %v1131
        %v1157 = vpop.f32.mrf.mxu0
        %v1158 = vadd.f32 0.0, %v1157
        %1159 = vdwg.mxu0
        %v1160 = vmul.f32 %v1155, 0.20412415
        %v1161 = vmul.f32 %v1158, 0.20412415
        %v1162 = vsel %vm871, %v1160, -inf
        %1163 = vmax.xlane.f32.xlu0 %v1162
        %v1164 = vpop.xlane.xlu0 %1163
        %v1165 = vsel %vm871, %v1161, -inf
        %1166 = vmax.xlane.f32.xlu0 %v1165
        %v1167 = vpop.xlane.xlu0 %1166
        %v1168 = vsub.f32 %v1160, %v1164
        %v1169 = vsub.f32 %v1161, %v1167
        %v1170 = vmul.f32 %v1168, 1.442695
        %v1171 = vpow.pop %v1170
        %v1172 = vmul.f32 %v1169, 1.442695
        %v1173 = vpow.pop %v1172
        %v1174 = vsel %vm871, %v1171, 0.0
        %1175 = vadd.xlane.f32.xlu0 %v1174
        %v1176 = vpop.xlane.xlu0 %1175
        %v1177 = vsel %vm871, %v1173, 0.0
        %1178 = vadd.xlane.f32.xlu0 %v1177
        %v1179 = vpop.xlane.xlu0 %1178
        %v1180 = vrcp.pop %v1176
        %v1181 = vrcp.pop %v1179
        %v1182 = vmul.f32 %v1171, %v1180
        %v1183 = vmul.f32 %v1173, %v1181
        %1184 = vrot.lane.b32.xlu0 %v828, 32
        %v1185 = vpop.permute.xlu0 %1184
        %1186 = vrot.lane.b32.xlu0 %v831, 32
        %v1187 = vpop.permute.xlu0 %1186
        %v1191 = vsel %vm871, %v1182, 0
        %v1194 = vsel %vm871, %v1183, 0
        %1196 = vmatpush.msra.mxu0 0.0
        %1197 = vmatpush.msra.mxu0 0.0
        %1198 = vmatpush.msra.mxu0 0.0
        %1199 = vmatpush.msra.mxu0 0.0
        %1200 = vmatpush.msra.mxu0 0.0
        %1201 = vmatpush.msra.mxu0 0.0
        %1202 = vmatpush.msra.mxu0 0.0
        %1203 = vmatpush.msra.mxu0 0.0
        %1204 = vmatpush.msra.mxu0 0.0
        %1205 = vmatpush.msra.mxu0 0.0
        %1206 = vmatpush.msra.mxu0 0.0
        %1207 = vmatpush.msra.mxu0 0.0
        %1208 = vmatpush.msra.mxu0 0.0
        %1209 = vmatpush.msra.mxu0 0.0
        %1210 = vmatpush.msra.mxu0 %v1187
        %1211 = vmatpush.msra.mxu0 %v1185
        %1212 = vmatmul.f32.gmra.mxu0 %v1191
        %v1213 = vpop.f32.mrf.mxu0
        %v1214 = vadd.f32 0.0, %v1213
        %1215 = vmatmul.f32.gmra.mxu0 %v1194
        %v1216 = vpop.f32.mrf.mxu0
        %v1217 = vadd.f32 0.0, %v1216
        %1218 = vdwg.mxu0
        %1221 = vrot.lane.b32.xlu0 %v1018, 32
        %v1222 = vpop.permute.xlu0 %1221
        %1223 = vrot.lane.b32.xlu0 %v1021, 32
        %v1224 = vpop.permute.xlu0 %1223
        %1229 = vrot.lane.b32.xlu0 %v1116, 64
        %v1230 = vpop.permute.xlu0 %1229
        %1231 = vrot.lane.b32.xlu0 %v1119, 64
        %v1232 = vpop.permute.xlu0 %1231
        %1237 = vrot.lane.b32.xlu0 %v1214, 96
        %v1238 = vpop.permute.xlu0 %1237
        %1239 = vrot.lane.b32.xlu0 %v1217, 96
        %v1240 = vpop.permute.xlu0 %1239
        %v1243 = vsel %vm833, %v918, %v1222
        %v1244 = vsel %vm833, %v921, %v1224
        %v1245 = vsel %vm421, %v1243, %v1230
        %v1246 = vsel %vm421, %v1244, %v1232
        %vm1247 = vcmask 785408
        %v1248 = vsel %vm1247, %v1245, %v1238
        %v1249 = vsel %vm1247, %v1246, %v1240
        %v1250 = vld [vmem:[#allocation10] sm:$0xff]
        %v1251 = vld [vmem:[#allocation10 + $0x8] sm:$0xff]
        %v1252 = vld [vmem:[#allocation10 + $0x10] sm:$0xff]
        %v1253 = vld [vmem:[#allocation10 + $0x18] sm:$0xff]
        %v1254 = vld [vmem:[#allocation10 + $0x20] sm:$0xff]
        %v1255 = vld [vmem:[#allocation10 + $0x28] sm:$0xff]
        %v1256 = vld [vmem:[#allocation10 + $0x30] sm:$0xff]
        %v1257 = vld [vmem:[#allocation10 + $0x38] sm:$0xff]
        %v1258 = vld [vmem:[#allocation10 + $0x40] sm:$0xff]
        %v1259 = vld [vmem:[#allocation10 + $0x48] sm:$0xff]
        %v1260 = vld [vmem:[#allocation10 + $0x50] sm:$0xff]
        %v1261 = vld [vmem:[#allocation10 + $0x58] sm:$0xff]
        %v1262 = vld [vmem:[#allocation10 + $0x60] sm:$0xff]
        %v1263 = vld [vmem:[#allocation10 + $0x68] sm:$0xff]
        %v1264 = vld [vmem:[#allocation10 + $0x70] sm:$0xff]
        %v1265 = vld [vmem:[#allocation10 + $0x78] sm:$0xff]
        %v1266 = vld [vmem:[%s7] sm:$0x1]
        %v1268 = vperm.slane %v1266, 0
        %1270 = vmatpush.msra.mxu0 %v1265
        %1271 = vmatpush.msra.mxu0 %v1264
        %1272 = vmatpush.msra.mxu0 %v1263
        %1273 = vmatpush.msra.mxu0 %v1262
        %1274 = vmatpush.msra.mxu0 %v1261
        %1275 = vmatpush.msra.mxu0 %v1260
        %1276 = vmatpush.msra.mxu0 %v1259
        %1277 = vmatpush.msra.mxu0 %v1258
        %1278 = vmatpush.msra.mxu0 %v1257
        %1279 = vmatpush.msra.mxu0 %v1256
        %1280 = vmatpush.msra.mxu0 %v1255
        %1281 = vmatpush.msra.mxu0 %v1254
        %1282 = vmatpush.msra.mxu0 %v1253
        %1283 = vmatpush.msra.mxu0 %v1252
        %1284 = vmatpush.msra.mxu0 %v1251
        %1285 = vmatpush.msra.mxu0 %v1250
        %1286 = vmatmul.f32.gmra.mxu0 %v1248
        %v1287 = vpop.f32.mrf.mxu0
        %v1288 = vadd.f32 %v1268, %v1287
        %1289 = vmatmul.f32.gmra.mxu0 %v1249
        %v1290 = vpop.f32.mrf.mxu0
        %v1291 = vadd.f32 %v1268, %v1290
        %1292 = vdwg.mxu0
        %1293 = vst [vmem:[%s391] sm:$0xff] %v1288
        %1294 = vst [vmem:[%s391 + $0x8] sm:$0xff] %v1291
        %s1295 = sand.u32 %s208, 1
        %s1296 = scalar_lea.sflag [#allocation4], %s1295
        %s1297 = sand.u32 %s208, 1
        %s1298 = smul.addr %s1297, 16
        %s1299 = scalar_lea.vmem [#allocation11], %s1298
        // Predicated region
        $region73: #{tpu_custom_call.1} parent=51 // pred_check
          %p1300 = pneg %p218
        $region74: #{tpu_custom_call.1} parent=51 // pred_check_branch
          %1302 = sbr.rel (%p1300) target = $region76
        $region75: #{tpu_custom_call.1} parent=51 // pred_region
          %1304 = vsyncadd %s1296, 0
          %s1305 = smul.addr %s27, 2
          %s1306 = smul.addr %s1305, 8
          %s1307 = scalar_lea.hbm %s8, %s1306
          %s1308 = sshll.u32 %s1299, 4
          %s1309 = int_to_ptr.vmem [resolvable:$true] %s1308
          %s1310 = sshll.u32 %s1307, 4
          %s1311 = int_to_ptr.hbm [resolvable:$true] %s1310
          %1316 = dma.vmem_to_hbm [thread:$0]  %s1309, 256, %s1311, %s1296, 128, 128, 8
        $region76: #{tpu_custom_call.1} parent=51 // pred_fallthru
          _
      $region52: #{tpu_custom_call.1} parent=5 // pred_fallthru
        _
      %p1317 = scmp.le.s32.totalorder 2, %s22
      // Predicated region
      $region77: #{tpu_custom_call.1} parent=5 // pred_check
        %p1318 = pneg %p1317
      $region78: #{tpu_custom_call.1} parent=5 // pred_check_branch
        %1320 = sbr.rel (%p1318) target = $region80
      $region79: #{tpu_custom_call.1} parent=5 // pred_region
        %s1321 = ssub.s32 %s22, 2
        // Predicated region
        $region81: #{tpu_custom_call.1} parent=79 // pred_check
          %p1322 = pneg %p224
        $region82: #{tpu_custom_call.1} parent=79 // pred_check_branch
          %1324 = sbr.rel (%p1322) target = $region84
        $region83: #{tpu_custom_call.1} parent=79 // pred_region
          %s1325 = sand.u32 %s209, 1
          %s1326 = scalar_lea.sflag [#allocation4], %s1325
          %s1327 = sand.u32 %s209, 1
          %s1328 = smul.addr %s1327, 16
          %s1329 = scalar_lea.vmem [#allocation11], %s1328
          %1331 = dma.done %s1326, 256
        $region84: #{tpu_custom_call.1} parent=79 // pred_fallthru
          _
      $region80: #{tpu_custom_call.1} parent=5 // pred_fallthru
        _
    $region6: #{tpu_custom_call.1} parent=1 // loop_footer
      %s26 = sadd.s32 1, %s22
    $region7: #{tpu_custom_call.1} parent=1 // loop_footer_branch
      %21 = sbr.rel target = $region3
    $region8: #{tpu_custom_call.1} parent=1 // loop_exit
      _
    %1332 = vsyncpa [#allocation3], 1
    %s1333 = scalar_lea.sflag [#allocation3], 1
    %1334 = vsyncpa %s1333, 1
    %1335 = vsyncpa [#allocation6], 1
    %1336 = vsyncpa [#allocation9], 1
    %1337 = vsyncpa [#allocation4], 1
    %s1338 = scalar_lea.sflag [#allocation4], 1
    %1339 = vsyncpa %s1338, 1

</llo_original>
